<compile_context>
chip_gen: v7x
topology: tpu7x:2x2x1
jax: 0.10.0
libtpu: 0.0.40
codegen_flags: <defaults>
</compile_context>

<pallas_src>
import functools

import jax
import jax.numpy as jnp
from jax import lax
from jax.experimental import pallas as pl
from jax.experimental.pallas import tpu as pltpu


_SQRT_HALF = 0.7071067811865475

# Numerical-Recipes erfc rational approximation (~1.2e-7 abs error); matches
# torch.nn.GELU()'s exact erf semantics to well within test tolerance.
_ERF_COEFFS = (-1.26551223, 1.00002368, 0.37409196, 0.09678418, -0.18628806,
               0.27886807, -1.13520398, 1.48851587, -0.82215223, 0.17087277)


def _erf_poly(t):
    c = _ERF_COEFFS
    poly = c[9]
    for k in range(8, -1, -1):
        poly = c[k] + t * poly
    return poly


def _erf_ref(x):
    # Reference (outside-kernel) version: exact division.
    a = jnp.abs(x)
    t = 1.0 / (1.0 + 0.5 * a)
    tau = t * jnp.exp(-a * a + _erf_poly(t))
    return jnp.where(x >= 0, 1.0 - tau, tau - 1.0)


def _gelu_ref(x):
    return 0.5 * x * (1.0 + _erf_ref(x * _SQRT_HALF))


def _erf_kernel(x):
    # In-kernel version: the divide is an EUP approx reciprocal + one Newton step
    # (2 mul + 1 sub), giving ~1e-8 relative error -> same result as exact division
    # at f32 while freeing VALU slots (GELU is evaluated twice per element and
    # dominates VPU time).
    a = jnp.abs(x)
    d = 1.0 + 0.5 * a
    r = pl.reciprocal(d, approx=True)
    t = r * (2.0 - d * r)
    tau = t * jnp.exp(-a * a + _erf_poly(t))
    return jnp.where(x >= 0, 1.0 - tau, tau - 1.0)


def _gelu_kernel(x):
    return 0.5 * x * (1.0 + _erf_kernel(x * _SQRT_HALF))


# --------------------------------------------------------------------------- kernel
def residual_kernel(x_ref, par_ref, bd_ref, msk_ref, o_ref, *, H, W):
    """One grid step = T full (batch*group) samples folded onto the sublane axis.

    x_ref  : (T*cg, H*W) f32  -- T samples, channel-major rows, lane-dense pixels
    par_ref: (T*cg, 15)  f32  -- packed per-row params:
                                 [0:9] depthwise 3x3 taps (dy-major, dx-minor)
                                 [9] dw bias   [10] bn1 gamma  [11] bn1 beta
                                 [12] pw bias  [13] bn2 gamma  [14] bn2 beta
    bd_ref : (T*cg, T*cg) f32 -- block-diagonal 1x1-conv matrix kron(I_T, pw_w)
    msk_ref: (8, H*W)     f32 -- precomputed 0/1 edge masks (rows 0..3 =
                                 left / right / top / bottom), grid-invariant
    o_ref  : (T*cg, H*W) f32
    """
    x = x_ref[...]
    par = par_ref[...]
    HW = H * W
    inv_hw = 1.0 / float(HW)

    m_l = msk_ref[0:1, :]      # w >= 1
    m_r = msk_ref[1:2, :]      # w <= W-2
    m_t = msk_ref[2:3, :]      # h >= 1
    m_b = msk_ref[3:4, :]      # h <= H-2

    # --- bandWiseConv: separable 3x3 'same' conv ----------------------------------
    # horizontal neighbours built once (XLU rolls; wrap across row boundaries is
    # killed by the per-lane column masks)
    xl = pltpu.roll(x, 1, 1) * m_l           # x[h, w-1]
    xr = pltpu.roll(x, HW - 1, 1) * m_r      # x[h, w+1]
    comb0 = xl * par[:, 0:1] + x * par[:, 1:2] + xr * par[:, 2:3]
    comb1 = xl * par[:, 3:4] + x * par[:, 4:5] + xr * par[:, 5:6]
    comb2 = xl * par[:, 6:7] + x * par[:, 7:8] + xr * par[:, 8:9]
    acc = (comb1 + par[:, 9:10]
           + pltpu.roll(comb0, W, 1) * m_t       # row above (h-1), top edge masked
           + pltpu.roll(comb2, HW - W, 1) * m_b)  # row below (h+1), bottom edge masked
    y = _gelu_kernel(acc)

    # BatchNorm2d (training mode, single-sample stats): fused sum / sum-of-squares,
    # variance clamped at 0 to guard against f32 cancellation -> rsqrt NaN.
    mean = jnp.sum(y, axis=1, keepdims=True) * inv_hw
    var = jnp.maximum(jnp.sum(y * y, axis=1, keepdims=True) * inv_hw - mean * mean, 0.0)
    y = (y - mean) * (lax.rsqrt(var + 1e-5) * par[:, 10:11]) + par[:, 11:12]

    # --- pixelWiseConv: T per-sample 1x1 convs == ONE block-diagonal MXU matmul ----
    z = jnp.dot(bd_ref[...], y, preferred_element_type=jnp.float32) + par[:, 12:13]
    z = _gelu_kernel(z)
    mean2 = jnp.sum(z, axis=1, keepdims=True) * inv_hw
    var2 = jnp.maximum(jnp.sum(z * z, axis=1, keepdims=True) * inv_hw - mean2 * mean2, 0.0)
    z = (z - mean2) * (lax.rsqrt(var2 + 1e-5) * par[:, 13:14]) + par[:, 14:15]

    # --- Concater (wrapper reshape) + Residual; re-read x_ref (already in VMEM) so
    # the input slab does not stay live in vregs across the whole body --------------
    o_ref[...] = z + x_ref[...]
    # TODO(synk): BatchNorm running-stat updates and the debug print in
    # Residual.forward are training-only / host side effects; not reproduced.


# -------------------------------------------------------------------------- wrapper
def _pick_samples_per_block(n, cg, hw):
    """Samples (T) folded into one grid block.

    Rules (perf-review driven):
      * rows = T*cg capped at 128: keeps the block-diagonal matmul inside one MXU
        tile on every generation and bounds the dense kron(I_T, pw) waste.
      * VMEM byte budget counts the double-buffered x/out blocks, the (rows, rows)
        bd tile, the packed params, and working temporaries; sized conservatively
        so it also fits v5e's 16 MiB scoped default and v7x's smaller VMEM.
      * rows kept a multiple of 8 sublanes (unless a single block covers the array).
      * prefer the largest block (fewest serial grid steps on one TensorCore); only
        split into exactly 2 'parallel' steps (v7x's 2 TCs) if each half still fills
        >= 64 sublane rows.
    """
    budget = 10 << 20
    cands = []
    for t in range(1, n + 1):
        if n % t:
            continue
        rows = t * cg
        if rows > 128:
            continue
        if rows % 8 != 0 and t != n:
            continue
        xb = rows * hw * 4
        bdb = rows * rows * 4
        parb = rows * 16 * 4
        total = 4 * xb + 2 * bdb + 2 * parb + 2 * xb   # dbl-buffered io + bd/par + temps
        if total > budget:
            continue
        cands.append(t)
    if not cands:
        return n
    t_best = max(cands)
    if n // t_best == 1:
        two = [t for t in cands if n // t == 2 and t * cg >= 64]
        if two:
            t_best = max(two)
    return t_best


def residual_forward(x, g, params):
    b, c, h, w = x.shape
    cg = c // g
    n = b * g
    hw = h * w
    dw_w, dw_b, pw_w, pw_b, g1, b1, g2, b2 = params

    t = _pick_samples_per_block(n, cg, hw)
    rows = t * cg

    # Grouper + spatial flatten are pure reshapes: rows ordered (batch, group,
    # channel-within-group); lane axis carries H*W (lane-dense, no padded copy).
    # TODO(synk): if H*W were not a multiple of 128, pad the lane axis in the
    # wrapper (and mask padded lanes out of the BN sums) to keep unmasked stores.
    xflat = x.reshape(n * cg, hw).astype(jnp.float32)

    # Pack all per-channel parameters into one tile, replicated over the t samples
    # that share a block (channels repeat every cg rows).
    par = jnp.concatenate([
        dw_w.reshape(cg, 9), dw_b.reshape(cg, 1),
        g1.reshape(cg, 1), b1.reshape(cg, 1),
        pw_b.reshape(cg, 1), g2.reshape(cg, 1), b2.reshape(cg, 1),
    ], axis=1).astype(jnp.float32)
    par = jnp.tile(par, (t, 1))                                          # (rows, 15)
    bd = jnp.kron(jnp.eye(t, dtype=jnp.float32), pw_w.astype(jnp.float32))  # (rows, rows)

    # Grid-invariant per-lane edge masks for the 'same' padding (computed once here
    # instead of re-deriving iota/div/compares every serial grid step).
    lane = jnp.arange(hw, dtype=jnp.int32)
    w_id = lane % w
    h_id = lane // w
    masks = jnp.stack([w_id >= 1, w_id <= w - 2,
                       h_id >= 1, h_id <= h - 2]).astype(jnp.float32)    # (4, hw)
    masks = jnp.concatenate([masks, jnp.zeros((4, hw), jnp.float32)], 0)  # (8, hw)

    out = pl.pallas_call(
        functools.partial(residual_kernel, H=h, W=w),
        out_shape=jax.ShapeDtypeStruct((n * cg, hw), jnp.float32),
        grid=(n // t,),
        in_specs=[
            pl.BlockSpec((rows, hw), lambda i: (i, 0)),            # x (conv + residual)
            pl.BlockSpec((rows, par.shape[1]), lambda i: (0, 0)),  # packed params
            pl.BlockSpec((rows, rows), lambda i: (0, 0)),          # block-diag 1x1 mat
            pl.BlockSpec((8, hw), lambda i: (0, 0)),               # edge masks
        ],
        out_specs=pl.BlockSpec((rows, hw), lambda i: (i, 0)),
        compiler_params=pltpu.CompilerParams(dimension_semantics=("parallel",)),
    )(xflat, par, bd, masks)

    # Concater: (B, g, C/g, H, W) -> (B, C, H, W)
    return out.reshape(b, c, h, w)


# ------------------------------------------------------------- pure-JAX reference
def residual_reference(x, g, params):
    b, c, h, w = x.shape
    cg = c // g
    dw_w, dw_b, pw_w, pw_b, g1, b1, g2, b2 = params
    xg = x.reshape(b * g, cg, h, w)
    xpad = jnp.pad(xg, ((0, 0), (0, 0), (1, 1), (1, 1)))
    acc = jnp.zeros_like(xg)
    for dy in range(3):
        for dx in range(3):
            acc = acc + xpad[:, :, dy:dy + h, dx:dx + w] * dw_w[None, :, dy:dy + 1, dx:dx + 1]
    acc = acc + dw_b[None]
    y = _gelu_ref(acc)
    mean = jnp.mean(y, axis=(2, 3), keepdims=True)
    var = jnp.mean((y - mean) ** 2, axis=(2, 3), keepdims=True)
    y = (y - mean) * lax.rsqrt(var + 1e-5) * g1[None] + b1[None]
    z = jnp.einsum("oc,nchw->nohw", pw_w, y, precision="highest")
    z = z + pw_b.reshape(1, cg, 1, 1)
    z = _gelu_ref(z)
    m2 = jnp.mean(z, axis=(2, 3), keepdims=True)
    v2 = jnp.mean((z - m2) ** 2, axis=(2, 3), keepdims=True)
    z = (z - m2) * lax.rsqrt(v2 + 1e-5) * g2.reshape(1, cg, 1, 1) + b2.reshape(1, cg, 1, 1)
    return z.reshape(b, c, h, w) + x


# ----------------------------------------------------------------------------- main
def init_params(key, cg):
    k1, k2, k3, k4 = jax.random.split(key, 4)
    # PyTorch Conv2d default init: U(-1/sqrt(fan_in), 1/sqrt(fan_in))
    bnd_dw = 1.0 / 3.0                       # depthwise fan_in = 1*3*3 = 9
    bnd_pw = 1.0 / jnp.sqrt(float(cg))       # 1x1 fan_in = cg
    dw_w = jax.random.uniform(k1, (cg, 3, 3), jnp.float32, -bnd_dw, bnd_dw)
    dw_b = jax.random.uniform(k2, (cg, 1, 1), jnp.float32, -bnd_dw, bnd_dw)
    pw_w = jax.random.uniform(k3, (cg, cg), jnp.float32, -bnd_pw, bnd_pw)
    pw_b = jax.random.uniform(k4, (cg, 1), jnp.float32, -bnd_pw, bnd_pw)
    # BatchNorm default affine init: gamma = 1, beta = 0
    g1 = jnp.ones((cg, 1, 1), jnp.float32)
    b1 = jnp.zeros((cg, 1, 1), jnp.float32)
    g2 = jnp.ones((cg, 1), jnp.float32)
    b2 = jnp.zeros((cg, 1), jnp.float32)
    return (dw_w, dw_b, pw_w, pw_b, g1, b1, g2, b2)


if __name__ == "__main__":
    key = jax.random.PRNGKey(0)
    B, C, H, W = 2, 16, 16, 16   # NCHW, like the PyTorch module's input
    G = 4                        # Grouper groups (cg = 4, as in the depth stack)
    kx, kp = jax.random.split(key)
    x = jax.random.normal(kx, (B, C, H, W), jnp.float32)
    params = init_params(kp, C // G)

    out = residual_forward(x, G, params)
    out = jax.block_until_ready(out)

    ref = residual_reference(x, G, params)
    assert out.shape == x.shape
    assert jnp.allclose(out, ref, atol=1e-3, rtol=1e-3), (
        float(jnp.max(jnp.abs(out - ref))))

    print("KERNEL_OK")
</pallas_src>

<mosaic_0001>
module attributes {stable_mosaic.version = 11 : i64} {
  func.func @residual_kernel(%arg0: i32, %arg1: memref<32x256xf32, #tpu.memory_space<vmem>>, %arg2: memref<32x15xf32, #tpu.memory_space<vmem>>, %arg3: memref<32x32xf32, #tpu.memory_space<vmem>>, %arg4: memref<8x256xf32, #tpu.memory_space<vmem>>, %arg5: memref<32x256xf32, #tpu.memory_space<vmem>>) attributes {dimension_semantics = [#tpu.dimension_semantics<parallel>], iteration_bounds = array<i64: 1>, scalar_prefetch = 0 : i64, scratch_operands = 0 : i64, tpu.core_type = #tpu.core_type<tc>, window_params = [{transform_indices = @transform_0, window_bounds = array<i64: 32, 256>}, {pipeline_mode = #tpu.pipeline_mode<synchronous>, transform_indices = @transform_1, window_bounds = array<i64: 32, 15>}, {pipeline_mode = #tpu.pipeline_mode<synchronous>, transform_indices = @transform_2, window_bounds = array<i64: 32, 32>}, {pipeline_mode = #tpu.pipeline_mode<synchronous>, transform_indices = @transform_3, window_bounds = array<i64: 8, 256>}, {transform_indices = @transform_4, window_bounds = array<i64: 32, 256>}]} {
    %c0 = arith.constant 0 : index
    %c0_0 = arith.constant 0 : index
    %0 = vector.load %arg1[%c0, %c0_0] : memref<32x256xf32, #tpu.memory_space<vmem>>, vector<32x256xf32>
    %c0_1 = arith.constant 0 : index
    %c0_2 = arith.constant 0 : index
    %1 = vector.load %arg2[%c0_1, %c0_2] : memref<32x15xf32, #tpu.memory_space<vmem>>, vector<32x15xf32>
    %c0_3 = arith.constant 0 : index
    %c0_4 = arith.constant 0 : index
    %2 = vector.load %arg4[%c0_3, %c0_4] : memref<8x256xf32, #tpu.memory_space<vmem>>, vector<1x256xf32>
    %c1 = arith.constant 1 : index
    %c0_5 = arith.constant 0 : index
    %3 = vector.load %arg4[%c1, %c0_5] : memref<8x256xf32, #tpu.memory_space<vmem>>, vector<1x256xf32>
    %c2 = arith.constant 2 : index
    %c0_6 = arith.constant 0 : index
    %4 = vector.load %arg4[%c2, %c0_6] : memref<8x256xf32, #tpu.memory_space<vmem>>, vector<1x256xf32>
    %c3 = arith.constant 3 : index
    %c0_7 = arith.constant 0 : index
    %5 = vector.load %arg4[%c3, %c0_7] : memref<8x256xf32, #tpu.memory_space<vmem>>, vector<1x256xf32>
    %c1_i32 = arith.constant 1 : i32
    %6 = tpu.dynamic_rotate %0 by %c1_i32 dim 1 : vector<32x256xf32>, i32 -> vector<32x256xf32>
    %7 = vector.broadcast %2 : vector<1x256xf32> to vector<32x256xf32>
    %8 = arith.mulf %6, %7 : vector<32x256xf32>
    %c255_i32 = arith.constant 255 : i32
    %9 = tpu.dynamic_rotate %0 by %c255_i32 dim 1 : vector<32x256xf32>, i32 -> vector<32x256xf32>
    %10 = vector.broadcast %3 : vector<1x256xf32> to vector<32x256xf32>
    %11 = arith.mulf %9, %10 : vector<32x256xf32>
    %12 = vector.extract_strided_slice %1 {offsets = [0, 0], sizes = [32, 1], strides = [1, 1]} : vector<32x15xf32> to vector<32x1xf32>
    %13 = vector.broadcast %12 : vector<32x1xf32> to vector<32x256xf32>
    %14 = arith.mulf %8, %13 : vector<32x256xf32>
    %15 = vector.extract_strided_slice %1 {offsets = [0, 1], sizes = [32, 1], strides = [1, 1]} : vector<32x15xf32> to vector<32x1xf32>
    %16 = vector.broadcast %15 : vector<32x1xf32> to vector<32x256xf32>
    %17 = arith.mulf %0, %16 : vector<32x256xf32>
    %18 = arith.addf %14, %17 : vector<32x256xf32>
    %19 = vector.extract_strided_slice %1 {offsets = [0, 2], sizes = [32, 1], strides = [1, 1]} : vector<32x15xf32> to vector<32x1xf32>
    %20 = vector.broadcast %19 : vector<32x1xf32> to vector<32x256xf32>
    %21 = arith.mulf %11, %20 : vector<32x256xf32>
    %22 = arith.addf %18, %21 : vector<32x256xf32>
    %23 = vector.extract_strided_slice %1 {offsets = [0, 3], sizes = [32, 1], strides = [1, 1]} : vector<32x15xf32> to vector<32x1xf32>
    %24 = vector.broadcast %23 : vector<32x1xf32> to vector<32x256xf32>
    %25 = arith.mulf %8, %24 : vector<32x256xf32>
    %26 = vector.extract_strided_slice %1 {offsets = [0, 4], sizes = [32, 1], strides = [1, 1]} : vector<32x15xf32> to vector<32x1xf32>
    %27 = vector.broadcast %26 : vector<32x1xf32> to vector<32x256xf32>
    %28 = arith.mulf %0, %27 : vector<32x256xf32>
    %29 = arith.addf %25, %28 : vector<32x256xf32>
    %30 = vector.extract_strided_slice %1 {offsets = [0, 5], sizes = [32, 1], strides = [1, 1]} : vector<32x15xf32> to vector<32x1xf32>
    %31 = vector.broadcast %30 : vector<32x1xf32> to vector<32x256xf32>
    %32 = arith.mulf %11, %31 : vector<32x256xf32>
    %33 = arith.addf %29, %32 : vector<32x256xf32>
    %34 = vector.extract_strided_slice %1 {offsets = [0, 6], sizes = [32, 1], strides = [1, 1]} : vector<32x15xf32> to vector<32x1xf32>
    %35 = vector.broadcast %34 : vector<32x1xf32> to vector<32x256xf32>
    %36 = arith.mulf %8, %35 : vector<32x256xf32>
    %37 = vector.extract_strided_slice %1 {offsets = [0, 7], sizes = [32, 1], strides = [1, 1]} : vector<32x15xf32> to vector<32x1xf32>
    %38 = vector.broadcast %37 : vector<32x1xf32> to vector<32x256xf32>
    %39 = arith.mulf %0, %38 : vector<32x256xf32>
    %40 = arith.addf %36, %39 : vector<32x256xf32>
    %41 = vector.extract_strided_slice %1 {offsets = [0, 8], sizes = [32, 1], strides = [1, 1]} : vector<32x15xf32> to vector<32x1xf32>
    %42 = vector.broadcast %41 : vector<32x1xf32> to vector<32x256xf32>
    %43 = arith.mulf %11, %42 : vector<32x256xf32>
    %44 = arith.addf %40, %43 : vector<32x256xf32>
    %45 = vector.extract_strided_slice %1 {offsets = [0, 9], sizes = [32, 1], strides = [1, 1]} : vector<32x15xf32> to vector<32x1xf32>
    %46 = vector.broadcast %45 : vector<32x1xf32> to vector<32x256xf32>
    %47 = arith.addf %33, %46 : vector<32x256xf32>
    %c16_i32 = arith.constant 16 : i32
    %48 = tpu.dynamic_rotate %22 by %c16_i32 dim 1 : vector<32x256xf32>, i32 -> vector<32x256xf32>
    %49 = vector.broadcast %4 : vector<1x256xf32> to vector<32x256xf32>
    %50 = arith.mulf %48, %49 : vector<32x256xf32>
    %51 = arith.addf %47, %50 : vector<32x256xf32>
    %c240_i32 = arith.constant 240 : i32
    %52 = tpu.dynamic_rotate %44 by %c240_i32 dim 1 : vector<32x256xf32>, i32 -> vector<32x256xf32>
    %53 = vector.broadcast %5 : vector<1x256xf32> to vector<32x256xf32>
    %54 = arith.mulf %52, %53 : vector<32x256xf32>
    %55 = arith.addf %51, %54 : vector<32x256xf32>
    %cst = arith.constant 5.000000e-01 : f32
    %56 = vector.broadcast %cst : f32 to vector<32x256xf32>
    %57 = arith.mulf %56, %55 : vector<32x256xf32>
    %cst_8 = arith.constant 0.707106769 : f32
    %58 = vector.broadcast %cst_8 : f32 to vector<32x256xf32>
    %59 = arith.mulf %55, %58 : vector<32x256xf32>
    %60 = math.absf %59 : vector<32x256xf32>
    %cst_9 = arith.constant 5.000000e-01 : f32
    %61 = vector.broadcast %cst_9 : f32 to vector<32x256xf32>
    %62 = arith.mulf %61, %60 : vector<32x256xf32>
    %cst_10 = arith.constant 1.000000e+00 : f32
    %63 = vector.broadcast %cst_10 : f32 to vector<32x256xf32>
    %64 = arith.addf %63, %62 : vector<32x256xf32>
    %65 = tpu.reciprocal %64 {approx = true} : vector<32x256xf32> -> vector<32x256xf32>
    %66 = arith.mulf %64, %65 : vector<32x256xf32>
    %cst_11 = arith.constant 2.000000e+00 : f32
    %67 = vector.broadcast %cst_11 : f32 to vector<32x256xf32>
    %68 = arith.subf %67, %66 : vector<32x256xf32>
    %69 = arith.mulf %65, %68 : vector<32x256xf32>
    %cst_12 = arith.constant 0.000000e+00 : f32
    %70 = vector.broadcast %cst_12 : f32 to vector<32x256xf32>
    %71 = arith.subf %70, %60 : vector<32x256xf32>
    %72 = arith.mulf %71, %60 : vector<32x256xf32>
    %cst_13 = arith.constant 0.170872763 : f32
    %73 = vector.broadcast %cst_13 : f32 to vector<32x256xf32>
    %74 = arith.mulf %69, %73 : vector<32x256xf32>
    %cst_14 = arith.constant -0.822152256 : f32
    %75 = vector.broadcast %cst_14 : f32 to vector<32x256xf32>
    %76 = arith.addf %75, %74 : vector<32x256xf32>
    %77 = arith.mulf %69, %76 : vector<32x256xf32>
    %cst_15 = arith.constant 1.48851585 : f32
    %78 = vector.broadcast %cst_15 : f32 to vector<32x256xf32>
    %79 = arith.addf %78, %77 : vector<32x256xf32>
    %80 = arith.mulf %69, %79 : vector<32x256xf32>
    %cst_16 = arith.constant -1.13520396 : f32
    %81 = vector.broadcast %cst_16 : f32 to vector<32x256xf32>
    %82 = arith.addf %81, %80 : vector<32x256xf32>
    %83 = arith.mulf %69, %82 : vector<32x256xf32>
    %cst_17 = arith.constant 0.278868079 : f32
    %84 = vector.broadcast %cst_17 : f32 to vector<32x256xf32>
    %85 = arith.addf %84, %83 : vector<32x256xf32>
    %86 = arith.mulf %69, %85 : vector<32x256xf32>
    %cst_18 = arith.constant -0.186288059 : f32
    %87 = vector.broadcast %cst_18 : f32 to vector<32x256xf32>
    %88 = arith.addf %87, %86 : vector<32x256xf32>
    %89 = arith.mulf %69, %88 : vector<32x256xf32>
    %cst_19 = arith.constant 0.0967841818 : f32
    %90 = vector.broadcast %cst_19 : f32 to vector<32x256xf32>
    %91 = arith.addf %90, %89 : vector<32x256xf32>
    %92 = arith.mulf %69, %91 : vector<32x256xf32>
    %cst_20 = arith.constant 0.374091953 : f32
    %93 = vector.broadcast %cst_20 : f32 to vector<32x256xf32>
    %94 = arith.addf %93, %92 : vector<32x256xf32>
    %95 = arith.mulf %69, %94 : vector<32x256xf32>
    %cst_21 = arith.constant 1.00002372 : f32
    %96 = vector.broadcast %cst_21 : f32 to vector<32x256xf32>
    %97 = arith.addf %96, %95 : vector<32x256xf32>
    %98 = arith.mulf %69, %97 : vector<32x256xf32>
    %cst_22 = arith.constant -1.26551223 : f32
    %99 = vector.broadcast %cst_22 : f32 to vector<32x256xf32>
    %100 = arith.addf %99, %98 : vector<32x256xf32>
    %101 = arith.addf %72, %100 : vector<32x256xf32>
    %102 = math.exp %101 : vector<32x256xf32>
    %103 = arith.mulf %69, %102 : vector<32x256xf32>
    %cst_23 = arith.constant 0.000000e+00 : f32
    %104 = vector.broadcast %cst_23 : f32 to vector<32x256xf32>
    %105 = arith.cmpf oge, %59, %104 : vector<32x256xf32>
    %cst_24 = arith.constant 1.000000e+00 : f32
    %106 = vector.broadcast %cst_24 : f32 to vector<32x256xf32>
    %107 = arith.subf %106, %103 : vector<32x256xf32>
    %cst_25 = arith.constant 1.000000e+00 : f32
    %108 = vector.broadcast %cst_25 : f32 to vector<32x256xf32>
    %109 = arith.subf %103, %108 : vector<32x256xf32>
    %110 = arith.select %105, %107, %109 : vector<32x256xi1>, vector<32x256xf32>
    %cst_26 = arith.constant 1.000000e+00 : f32
    %111 = vector.broadcast %cst_26 : f32 to vector<32x256xf32>
    %112 = arith.addf %111, %110 : vector<32x256xf32>
    %113 = arith.mulf %57, %112 : vector<32x256xf32>
    %cst_27 = arith.constant dense<0.000000e+00> : vector<32xf32>
    %114 = vector.multi_reduction <add>, %113, %cst_27 [1] : vector<32x256xf32> to vector<32xf32>
    %115 = vector.shape_cast %114 : vector<32xf32> to vector<32x1xf32>
    %cst_28 = arith.constant 3.906250e-03 : f32
    %116 = vector.broadcast %cst_28 : f32 to vector<32x1xf32>
    %117 = arith.mulf %115, %116 : vector<32x1xf32>
    %118 = arith.mulf %113, %113 : vector<32x256xf32>
    %cst_29 = arith.constant dense<0.000000e+00> : vector<32xf32>
    %119 = vector.multi_reduction <add>, %118, %cst_29 [1] : vector<32x256xf32> to vector<32xf32>
    %120 = vector.shape_cast %119 : vector<32xf32> to vector<32x1xf32>
    %cst_30 = arith.constant 3.906250e-03 : f32
    %121 = vector.broadcast %cst_30 : f32 to vector<32x1xf32>
    %122 = arith.mulf %120, %121 : vector<32x1xf32>
    %123 = arith.mulf %117, %117 : vector<32x1xf32>
    %124 = arith.subf %122, %123 : vector<32x1xf32>
    %cst_31 = arith.constant 0.000000e+00 : f32
    %125 = vector.broadcast %cst_31 : f32 to vector<32x1xf32>
    %126 = arith.maximumf %124, %125 : vector<32x1xf32>
    %127 = vector.broadcast %117 : vector<32x1xf32> to vector<32x256xf32>
    %128 = arith.subf %113, %127 : vector<32x256xf32>
    %cst_32 = arith.constant 9.99999974E-6 : f32
    %129 = vector.broadcast %cst_32 : f32 to vector<32x1xf32>
    %130 = arith.addf %126, %129 : vector<32x1xf32>
    %131 = math.rsqrt %130 : vector<32x1xf32>
    %132 = vector.extract_strided_slice %1 {offsets = [0, 10], sizes = [32, 1], strides = [1, 1]} : vector<32x15xf32> to vector<32x1xf32>
    %133 = arith.mulf %131, %132 : vector<32x1xf32>
    %134 = vector.broadcast %133 : vector<32x1xf32> to vector<32x256xf32>
    %135 = arith.mulf %128, %134 : vector<32x256xf32>
    %136 = vector.extract_strided_slice %1 {offsets = [0, 11], sizes = [32, 1], strides = [1, 1]} : vector<32x15xf32> to vector<32x1xf32>
    %137 = vector.broadcast %136 : vector<32x1xf32> to vector<32x256xf32>
    %138 = arith.addf %135, %137 : vector<32x256xf32>
    %c0_33 = arith.constant 0 : index
    %c0_34 = arith.constant 0 : index
    %139 = vector.load %arg3[%c0_33, %c0_34] : memref<32x32xf32, #tpu.memory_space<vmem>>, vector<32x32xf32>
    %cst_35 = arith.constant dense<0.000000e+00> : vector<32x256xf32>
    %140 = tpu.matmul %139, %138, %cst_35 {dimension_numbers = #tpu.dot_dimension_numbers<[1], [0], [0], [1], [0, 0, 1, 1], [], []>} : vector<32x32xf32>, vector<32x256xf32>, vector<32x256xf32> -> vector<32x256xf32>
    %141 = vector.extract_strided_slice %1 {offsets = [0, 12], sizes = [32, 1], strides = [1, 1]} : vector<32x15xf32> to vector<32x1xf32>
    %142 = vector.broadcast %141 : vector<32x1xf32> to vector<32x256xf32>
    %143 = arith.addf %140, %142 : vector<32x256xf32>
    %cst_36 = arith.constant 5.000000e-01 : f32
    %144 = vector.broadcast %cst_36 : f32 to vector<32x256xf32>
    %145 = arith.mulf %144, %143 : vector<32x256xf32>
    %cst_37 = arith.constant 0.707106769 : f32
    %146 = vector.broadcast %cst_37 : f32 to vector<32x256xf32>
    %147 = arith.mulf %143, %146 : vector<32x256xf32>
    %148 = math.absf %147 : vector<32x256xf32>
    %cst_38 = arith.constant 5.000000e-01 : f32
    %149 = vector.broadcast %cst_38 : f32 to vector<32x256xf32>
    %150 = arith.mulf %149, %148 : vector<32x256xf32>
    %cst_39 = arith.constant 1.000000e+00 : f32
    %151 = vector.broadcast %cst_39 : f32 to vector<32x256xf32>
    %152 = arith.addf %151, %150 : vector<32x256xf32>
    %153 = tpu.reciprocal %152 {approx = true} : vector<32x256xf32> -> vector<32x256xf32>
    %154 = arith.mulf %152, %153 : vector<32x256xf32>
    %cst_40 = arith.constant 2.000000e+00 : f32
    %155 = vector.broadcast %cst_40 : f32 to vector<32x256xf32>
    %156 = arith.subf %155, %154 : vector<32x256xf32>
    %157 = arith.mulf %153, %156 : vector<32x256xf32>
    %cst_41 = arith.constant 0.000000e+00 : f32
    %158 = vector.broadcast %cst_41 : f32 to vector<32x256xf32>
    %159 = arith.subf %158, %148 : vector<32x256xf32>
    %160 = arith.mulf %159, %148 : vector<32x256xf32>
    %cst_42 = arith.constant 0.170872763 : f32
    %161 = vector.broadcast %cst_42 : f32 to vector<32x256xf32>
    %162 = arith.mulf %157, %161 : vector<32x256xf32>
    %cst_43 = arith.constant -0.822152256 : f32
    %163 = vector.broadcast %cst_43 : f32 to vector<32x256xf32>
    %164 = arith.addf %163, %162 : vector<32x256xf32>
    %165 = arith.mulf %157, %164 : vector<32x256xf32>
    %cst_44 = arith.constant 1.48851585 : f32
    %166 = vector.broadcast %cst_44 : f32 to vector<32x256xf32>
    %167 = arith.addf %166, %165 : vector<32x256xf32>
    %168 = arith.mulf %157, %167 : vector<32x256xf32>
    %cst_45 = arith.constant -1.13520396 : f32
    %169 = vector.broadcast %cst_45 : f32 to vector<32x256xf32>
    %170 = arith.addf %169, %168 : vector<32x256xf32>
    %171 = arith.mulf %157, %170 : vector<32x256xf32>
    %cst_46 = arith.constant 0.278868079 : f32
    %172 = vector.broadcast %cst_46 : f32 to vector<32x256xf32>
    %173 = arith.addf %172, %171 : vector<32x256xf32>
    %174 = arith.mulf %157, %173 : vector<32x256xf32>
    %cst_47 = arith.constant -0.186288059 : f32
    %175 = vector.broadcast %cst_47 : f32 to vector<32x256xf32>
    %176 = arith.addf %175, %174 : vector<32x256xf32>
    %177 = arith.mulf %157, %176 : vector<32x256xf32>
    %cst_48 = arith.constant 0.0967841818 : f32
    %178 = vector.broadcast %cst_48 : f32 to vector<32x256xf32>
    %179 = arith.addf %178, %177 : vector<32x256xf32>
    %180 = arith.mulf %157, %179 : vector<32x256xf32>
    %cst_49 = arith.constant 0.374091953 : f32
    %181 = vector.broadcast %cst_49 : f32 to vector<32x256xf32>
    %182 = arith.addf %181, %180 : vector<32x256xf32>
    %183 = arith.mulf %157, %182 : vector<32x256xf32>
    %cst_50 = arith.constant 1.00002372 : f32
    %184 = vector.broadcast %cst_50 : f32 to vector<32x256xf32>
    %185 = arith.addf %184, %183 : vector<32x256xf32>
    %186 = arith.mulf %157, %185 : vector<32x256xf32>
    %cst_51 = arith.constant -1.26551223 : f32
    %187 = vector.broadcast %cst_51 : f32 to vector<32x256xf32>
    %188 = arith.addf %187, %186 : vector<32x256xf32>
    %189 = arith.addf %160, %188 : vector<32x256xf32>
    %190 = math.exp %189 : vector<32x256xf32>
    %191 = arith.mulf %157, %190 : vector<32x256xf32>
    %cst_52 = arith.constant 0.000000e+00 : f32
    %192 = vector.broadcast %cst_52 : f32 to vector<32x256xf32>
    %193 = arith.cmpf oge, %147, %192 : vector<32x256xf32>
    %cst_53 = arith.constant 1.000000e+00 : f32
    %194 = vector.broadcast %cst_53 : f32 to vector<32x256xf32>
    %195 = arith.subf %194, %191 : vector<32x256xf32>
    %cst_54 = arith.constant 1.000000e+00 : f32
    %196 = vector.broadcast %cst_54 : f32 to vector<32x256xf32>
    %197 = arith.subf %191, %196 : vector<32x256xf32>
    %198 = arith.select %193, %195, %197 : vector<32x256xi1>, vector<32x256xf32>
    %cst_55 = arith.constant 1.000000e+00 : f32
    %199 = vector.broadcast %cst_55 : f32 to vector<32x256xf32>
    %200 = arith.addf %199, %198 : vector<32x256xf32>
    %201 = arith.mulf %145, %200 : vector<32x256xf32>
    %cst_56 = arith.constant dense<0.000000e+00> : vector<32xf32>
    %202 = vector.multi_reduction <add>, %201, %cst_56 [1] : vector<32x256xf32> to vector<32xf32>
    %203 = vector.shape_cast %202 : vector<32xf32> to vector<32x1xf32>
    %cst_57 = arith.constant 3.906250e-03 : f32
    %204 = vector.broadcast %cst_57 : f32 to vector<32x1xf32>
    %205 = arith.mulf %203, %204 : vector<32x1xf32>
    %206 = arith.mulf %201, %201 : vector<32x256xf32>
    %cst_58 = arith.constant dense<0.000000e+00> : vector<32xf32>
    %207 = vector.multi_reduction <add>, %206, %cst_58 [1] : vector<32x256xf32> to vector<32xf32>
    %208 = vector.shape_cast %207 : vector<32xf32> to vector<32x1xf32>
    %cst_59 = arith.constant 3.906250e-03 : f32
    %209 = vector.broadcast %cst_59 : f32 to vector<32x1xf32>
    %210 = arith.mulf %208, %209 : vector<32x1xf32>
    %211 = arith.mulf %205, %205 : vector<32x1xf32>
    %212 = arith.subf %210, %211 : vector<32x1xf32>
    %cst_60 = arith.constant 0.000000e+00 : f32
    %213 = vector.broadcast %cst_60 : f32 to vector<32x1xf32>
    %214 = arith.maximumf %212, %213 : vector<32x1xf32>
    %215 = vector.broadcast %205 : vector<32x1xf32> to vector<32x256xf32>
    %216 = arith.subf %201, %215 : vector<32x256xf32>
    %cst_61 = arith.constant 9.99999974E-6 : f32
    %217 = vector.broadcast %cst_61 : f32 to vector<32x1xf32>
    %218 = arith.addf %214, %217 : vector<32x1xf32>
    %219 = math.rsqrt %218 : vector<32x1xf32>
    %220 = vector.extract_strided_slice %1 {offsets = [0, 13], sizes = [32, 1], strides = [1, 1]} : vector<32x15xf32> to vector<32x1xf32>
    %221 = arith.mulf %219, %220 : vector<32x1xf32>
    %222 = vector.broadcast %221 : vector<32x1xf32> to vector<32x256xf32>
    %223 = arith.mulf %216, %222 : vector<32x256xf32>
    %224 = vector.extract_strided_slice %1 {offsets = [0, 14], sizes = [32, 1], strides = [1, 1]} : vector<32x15xf32> to vector<32x1xf32>
    %225 = vector.broadcast %224 : vector<32x1xf32> to vector<32x256xf32>
    %226 = arith.addf %223, %225 : vector<32x256xf32>
    %c0_62 = arith.constant 0 : index
    %c0_63 = arith.constant 0 : index
    %227 = vector.load %arg1[%c0_62, %c0_63] : memref<32x256xf32, #tpu.memory_space<vmem>>, vector<32x256xf32>
    %228 = arith.addf %226, %227 : vector<32x256xf32>
    %c0_64 = arith.constant 0 : index
    %c0_65 = arith.constant 0 : index
    %229 = vector.load %arg5[%c0_64, %c0_65] : memref<32x256xf32, #tpu.memory_space<vmem>>, vector<32x256xf32>
    tpu.vector_store %arg5[%c0_64, %c0_65], %228 {strides = array<i32>} : memref<32x256xf32, #tpu.memory_space<vmem>>, vector<32x256xf32>,
    return
  }
  func.func @transform_0(%arg0: i32) -> (i32, i32) {
    %c0_i32 = arith.constant 0 : i32
    %c0_i32_0 = arith.constant 0 : i32
    return %arg0, %c0_i32 : i32, i32
  }
  func.func @transform_1(%arg0: i32) -> (i32, i32) {
    %c0_i32 = arith.constant 0 : i32
    %c0_i32_0 = arith.constant 0 : i32
    %c0_i32_1 = arith.constant 0 : i32
    return %c0_i32, %c0_i32_0 : i32, i32
  }
  func.func @transform_2(%arg0: i32) -> (i32, i32) {
    %c0_i32 = arith.constant 0 : i32
    %c0_i32_0 = arith.constant 0 : i32
    %c0_i32_1 = arith.constant 0 : i32
    return %c0_i32, %c0_i32_0 : i32, i32
  }
  func.func @transform_3(%arg0: i32) -> (i32, i32) {
    %c0_i32 = arith.constant 0 : i32
    %c0_i32_0 = arith.constant 0 : i32
    %c0_i32_1 = arith.constant 0 : i32
    return %c0_i32, %c0_i32_0 : i32, i32
  }
  func.func @transform_4(%arg0: i32) -> (i32, i32) {
    %c0_i32 = arith.constant 0 : i32
    %c0_i32_0 = arith.constant 0 : i32
    return %arg0, %c0_i32 : i32, i32
  }
}

</mosaic_0001>

<llo_original>
// kernel: tpu_custom_call.1
$region0: #{tpu_custom_call.1}
  #allocation0 [shape = 'u32[]', space=smem, size = 0x4, offset = 0x4, fixed_abs, tag = 'smem constant byte address 0x4 - core index']
  #allocation1 [shape = 'u32[144,128]{1,0:T(1,128)}', space=vmem, size = 0x12000, scoped, tag = 'internal scratch']
  %s0 = inlined_call_operand.hbm [shape: f32[32,256], index: 0, kind: input, shape index: {}]
  %s1 = inlined_call_operand.vmem [shape: f32[32,15], index: 1, kind: input, shape index: {}]
  %s2 = inlined_call_operand.vmem [shape: f32[32,32], index: 2, kind: input, shape index: {}]
  %s3 = inlined_call_operand.vmem [shape: f32[8,256], index: 3, kind: input, shape index: {}]
  %s4 = inlined_call_operand.hbm [shape: f32[32,256], index: 4, kind: output, shape index: {}]
  %s5 = sld [smem:[#allocation0]]
  $region30: #{tpu_custom_call.1} parent=0
    _
  %s7 = ssub.s32 1, %s5
  %s8 = scalar_select 0, %s7, %s5
  $region1: #{tpu_custom_call.1} parent=0
    #allocation2 [shape = 'u8[32768]{0}', space=vmem, size = 0x8000, scoped, tag = 'input window, operand 0, single buffered']
    #allocation3 [shape = 's32[1]{0}', space=sflag, size = 0x4, scoped, tag = 'scoped memory for tpu_custom_call.1']
    #allocation4 [shape = 's32[1]{0}', space=sflag, size = 0x4, scoped, tag = 'scoped memory for tpu_custom_call.1']
    #allocation5 [shape = 'u8[32768]{0}', space=vmem, size = 0x8000, scoped, tag = 'output window, operand 0, single buffered']
    %9 = vsyncpa [#allocation3], 0
    %10 = vsyncpa [#allocation4], 0
    // Predicated region
    $region2: #{tpu_custom_call.1} parent=1 // pred_check
      _
    $region3: #{tpu_custom_call.1} parent=1 // pred_check_branch
      %12 = sbr.rel (0) target = $region5
    $region4: #{tpu_custom_call.1} parent=1 // pred_region
      %s14 = ssub.s32 1024, 1024
      %15 = vsyncadd [#allocation3], %s14
      %s16 = sshll.u32 [#allocation2], 4
      %s17 = int_to_ptr.vmem [resolvable:$true] %s16
      %22 = dma.hbm_to_vmem [thread:$0]  %s0, 1024, %s17, [#allocation3], 256, 256, 16
    $region5: #{tpu_custom_call.1} parent=1 // pred_fallthru
      _
    // Predicated region
    $region6: #{tpu_custom_call.1} parent=1 // pred_check
      _
    $region7: #{tpu_custom_call.1} parent=1 // pred_check_branch
      %24 = sbr.rel (0) target = $region9
    $region8: #{tpu_custom_call.1} parent=1 // pred_region
      _
    $region9: #{tpu_custom_call.1} parent=1 // pred_fallthru
      _
    // Predicated region
    $region10: #{tpu_custom_call.1} parent=1 // pred_check
      _
    $region11: #{tpu_custom_call.1} parent=1 // pred_check_branch
      %26 = sbr.rel (0) target = $region13
    $region12: #{tpu_custom_call.1} parent=1 // pred_region
      _
    $region13: #{tpu_custom_call.1} parent=1 // pred_fallthru
      _
    // Predicated region
    $region14: #{tpu_custom_call.1} parent=1 // pred_check
      _
    $region15: #{tpu_custom_call.1} parent=1 // pred_check_branch
      %28 = sbr.rel (0) target = $region17
    $region16: #{tpu_custom_call.1} parent=1 // pred_region
      _
    $region17: #{tpu_custom_call.1} parent=1 // pred_fallthru
      _
    // Predicated region
    $region18: #{tpu_custom_call.1} parent=1 // pred_check
      _
    $region19: #{tpu_custom_call.1} parent=1 // pred_check_branch
      %30 = sbr.rel (0) target = $region21
    $region20: #{tpu_custom_call.1} parent=1 // pred_region
      %31 = dma.done [#allocation3], 1024
    $region21: #{tpu_custom_call.1} parent=1 // pred_fallthru
      _
    %v32 = vld [vmem:[#allocation2] sm:$0xff]
    %v33 = vld [vmem:[#allocation2 + $0x8] sm:$0xff]
    %v34 = vld [vmem:[#allocation2 + $0x10] sm:$0xff]
    %v35 = vld [vmem:[#allocation2 + $0x18] sm:$0xff]
    %v36 = vld [vmem:[#allocation2 + $0x20] sm:$0xff]
    %v37 = vld [vmem:[#allocation2 + $0x28] sm:$0xff]
    %v38 = vld [vmem:[#allocation2 + $0x30] sm:$0xff]
    %v39 = vld [vmem:[#allocation2 + $0x38] sm:$0xff]
    %v40 = vld [vmem:[%s1] sm:$0xff]
    %v41 = vld [vmem:[%s1 + $0x8] sm:$0xff]
    %v42 = vld [vmem:[%s1 + $0x10] sm:$0xff]
    %v43 = vld [vmem:[%s1 + $0x18] sm:$0xff]
    %v44 = vld [vmem:[%s3] ss:$8 sm:$0x3]
    %s45 = scalar_lea.vmem %s3, 1
    %v46 = vld [vmem:[%s45] ss:$8 sm:$0x3]
    %s47 = scalar_lea.vmem %s3, 2
    %v48 = vld [vmem:[%s47] ss:$8 sm:$0x3]
    %s49 = scalar_lea.vmem %s3, 3
    %v50 = vld [vmem:[%s49] ss:$8 sm:$0x3]
    %51 = vrot.lane.b32.xlu0 %v32, 1
    %v52 = vpop.permute.xlu0 %51
    %53 = vrot.lane.b32.xlu0 %v34, 1
    %v54 = vpop.permute.xlu0 %53
    %55 = vrot.lane.b32.xlu0 %v36, 1
    %v56 = vpop.permute.xlu0 %55
    %57 = vrot.lane.b32.xlu0 %v38, 1
    %v58 = vpop.permute.xlu0 %57
    %59 = vrot.lane.b32.xlu0 %v33, 1
    %v60 = vpop.permute.xlu0 %59
    %61 = vrot.lane.b32.xlu0 %v35, 1
    %v62 = vpop.permute.xlu0 %61
    %63 = vrot.lane.b32.xlu0 %v37, 1
    %v64 = vpop.permute.xlu0 %63
    %65 = vrot.lane.b32.xlu0 %v39, 1
    %v66 = vpop.permute.xlu0 %65
    %v67 = vlaneseq
    %v68 = vand.u32 %v67, 127
    %vm69 = vcmp.lt.s32.totalorder %v68, 1
    %v70 = vsel %vm69, %v52, %v60
    %v71 = vsel %vm69, %v54, %v62
    %v72 = vsel %vm69, %v56, %v64
    %v73 = vsel %vm69, %v58, %v66
    %v74 = vsel %vm69, %v60, %v52
    %v75 = vsel %vm69, %v62, %v54
    %v76 = vsel %vm69, %v64, %v56
    %v77 = vsel %vm69, %v66, %v58
    %v79 = vlaneseq
    %v80 = vshrl.u32 %v79, 7
    %v81 = vsub.s32 0, %v80
    %v82 = vrot.slane %v44, %v81
    %v83 = vlaneseq
    %v84 = vshrl.u32 %v83, 7
    %v85 = vsub.s32 1, %v84
    %v86 = vrot.slane %v44, %v85
    %v89 = vmul.f32 %v74, %v82
    %v90 = vmul.f32 %v70, %v86
    %v91 = vmul.f32 %v75, %v82
    %v92 = vmul.f32 %v71, %v86
    %v93 = vmul.f32 %v76, %v82
    %v94 = vmul.f32 %v72, %v86
    %v95 = vmul.f32 %v77, %v82
    %v96 = vmul.f32 %v73, %v86
    %97 = vrot.lane.b32.xlu0 %v32, 127
    %v98 = vpop.permute.xlu0 %97
    %99 = vrot.lane.b32.xlu0 %v34, 127
    %v100 = vpop.permute.xlu0 %99
    %101 = vrot.lane.b32.xlu0 %v36, 127
    %v102 = vpop.permute.xlu0 %101
    %103 = vrot.lane.b32.xlu0 %v38, 127
    %v104 = vpop.permute.xlu0 %103
    %105 = vrot.lane.b32.xlu0 %v33, 127
    %v106 = vpop.permute.xlu0 %105
    %107 = vrot.lane.b32.xlu0 %v35, 127
    %v108 = vpop.permute.xlu0 %107
    %109 = vrot.lane.b32.xlu0 %v37, 127
    %v110 = vpop.permute.xlu0 %109
    %111 = vrot.lane.b32.xlu0 %v39, 127
    %v112 = vpop.permute.xlu0 %111
    %vm113 = vcmp.lt.s32.totalorder %v68, 127
    %v114 = vsel %vm113, %v98, %v106
    %v115 = vsel %vm113, %v100, %v108
    %v116 = vsel %vm113, %v102, %v110
    %v117 = vsel %vm113, %v104, %v112
    %v118 = vsel %vm113, %v106, %v98
    %v119 = vsel %vm113, %v108, %v100
    %v120 = vsel %vm113, %v110, %v102
    %v121 = vsel %vm113, %v112, %v104
    %v123 = vlaneseq
    %v124 = vshrl.u32 %v123, 7
    %v125 = vsub.s32 0, %v124
    %v126 = vrot.slane %v46, %v125
    %v127 = vlaneseq
    %v128 = vshrl.u32 %v127, 7
    %v129 = vsub.s32 1, %v128
    %v130 = vrot.slane %v46, %v129
    %v133 = vmul.f32 %v114, %v126
    %v134 = vmul.f32 %v118, %v130
    %v135 = vmul.f32 %v115, %v126
    %v136 = vmul.f32 %v119, %v130
    %v137 = vmul.f32 %v116, %v126
    %v138 = vmul.f32 %v120, %v130
    %v139 = vmul.f32 %v117, %v126
    %v140 = vmul.f32 %v121, %v130
    %142 = vset.pattern.permute.xlu0 0
    %143 = vperm.xlu0 %142, %v40
    %v144 = vpop.permute.xlu0 %143
    %147 = vset.pattern.permute.xlu0 0
    %148 = vperm.xlu0 %147, %v41
    %v149 = vpop.permute.xlu0 %148
    %152 = vset.pattern.permute.xlu0 0
    %153 = vperm.xlu0 %152, %v42
    %v154 = vpop.permute.xlu0 %153
    %157 = vset.pattern.permute.xlu0 0
    %158 = vperm.xlu0 %157, %v43
    %v159 = vpop.permute.xlu0 %158
    %v161 = vmul.f32 %v89, %v144
    %v162 = vmul.f32 %v90, %v144
    %v163 = vmul.f32 %v91, %v149
    %v164 = vmul.f32 %v92, %v149
    %v165 = vmul.f32 %v93, %v154
    %v166 = vmul.f32 %v94, %v154
    %v167 = vmul.f32 %v95, %v159
    %v168 = vmul.f32 %v96, %v159
    %169 = vset.pattern.permute.xlu0 1
    %170 = vperm.xlu0 %169, %v40
    %v171 = vpop.permute.xlu0 %170
    %173 = vset.pattern.permute.xlu0 1
    %174 = vperm.xlu0 %173, %v41
    %v175 = vpop.permute.xlu0 %174
    %177 = vset.pattern.permute.xlu0 1
    %178 = vperm.xlu0 %177, %v42
    %v179 = vpop.permute.xlu0 %178
    %181 = vset.pattern.permute.xlu0 1
    %182 = vperm.xlu0 %181, %v43
    %v183 = vpop.permute.xlu0 %182
    %v185 = vmul.f32 %v32, %v171
    %v186 = vmul.f32 %v33, %v171
    %v187 = vmul.f32 %v34, %v175
    %v188 = vmul.f32 %v35, %v175
    %v189 = vmul.f32 %v36, %v179
    %v190 = vmul.f32 %v37, %v179
    %v191 = vmul.f32 %v38, %v183
    %v192 = vmul.f32 %v39, %v183
    %v193 = vadd.f32 %v161, %v185
    %v194 = vadd.f32 %v162, %v186
    %v195 = vadd.f32 %v163, %v187
    %v196 = vadd.f32 %v164, %v188
    %v197 = vadd.f32 %v165, %v189
    %v198 = vadd.f32 %v166, %v190
    %v199 = vadd.f32 %v167, %v191
    %v200 = vadd.f32 %v168, %v192
    %201 = vset.pattern.permute.xlu0 2
    %202 = vperm.xlu0 %201, %v40
    %v203 = vpop.permute.xlu0 %202
    %205 = vset.pattern.permute.xlu0 2
    %206 = vperm.xlu0 %205, %v41
    %v207 = vpop.permute.xlu0 %206
    %209 = vset.pattern.permute.xlu0 2
    %210 = vperm.xlu0 %209, %v42
    %v211 = vpop.permute.xlu0 %210
    %213 = vset.pattern.permute.xlu0 2
    %214 = vperm.xlu0 %213, %v43
    %v215 = vpop.permute.xlu0 %214
    %v217 = vmul.f32 %v133, %v203
    %v218 = vmul.f32 %v134, %v203
    %v219 = vmul.f32 %v135, %v207
    %v220 = vmul.f32 %v136, %v207
    %v221 = vmul.f32 %v137, %v211
    %v222 = vmul.f32 %v138, %v211
    %v223 = vmul.f32 %v139, %v215
    %v224 = vmul.f32 %v140, %v215
    %v225 = vadd.f32 %v193, %v217
    %v226 = vadd.f32 %v194, %v218
    %v227 = vadd.f32 %v195, %v219
    %v228 = vadd.f32 %v196, %v220
    %v229 = vadd.f32 %v197, %v221
    %v230 = vadd.f32 %v198, %v222
    %v231 = vadd.f32 %v199, %v223
    %v232 = vadd.f32 %v200, %v224
    %233 = vset.pattern.permute.xlu0 3
    %234 = vperm.xlu0 %233, %v40
    %v235 = vpop.permute.xlu0 %234
    %237 = vset.pattern.permute.xlu0 3
    %238 = vperm.xlu0 %237, %v41
    %v239 = vpop.permute.xlu0 %238
    %241 = vset.pattern.permute.xlu0 3
    %242 = vperm.xlu0 %241, %v42
    %v243 = vpop.permute.xlu0 %242
    %245 = vset.pattern.permute.xlu0 3
    %246 = vperm.xlu0 %245, %v43
    %v247 = vpop.permute.xlu0 %246
    %v249 = vmul.f32 %v89, %v235
    %v250 = vmul.f32 %v90, %v235
    %v251 = vmul.f32 %v91, %v239
    %v252 = vmul.f32 %v92, %v239
    %v253 = vmul.f32 %v93, %v243
    %v254 = vmul.f32 %v94, %v243
    %v255 = vmul.f32 %v95, %v247
    %v256 = vmul.f32 %v96, %v247
    %257 = vset.pattern.permute.xlu0 4
    %258 = vperm.xlu0 %257, %v40
    %v259 = vpop.permute.xlu0 %258
    %261 = vset.pattern.permute.xlu0 4
    %262 = vperm.xlu0 %261, %v41
    %v263 = vpop.permute.xlu0 %262
    %265 = vset.pattern.permute.xlu0 4
    %266 = vperm.xlu0 %265, %v42
    %v267 = vpop.permute.xlu0 %266
    %269 = vset.pattern.permute.xlu0 4
    %270 = vperm.xlu0 %269, %v43
    %v271 = vpop.permute.xlu0 %270
    %v273 = vmul.f32 %v32, %v259
    %v274 = vmul.f32 %v33, %v259
    %v275 = vmul.f32 %v34, %v263
    %v276 = vmul.f32 %v35, %v263
    %v277 = vmul.f32 %v36, %v267
    %v278 = vmul.f32 %v37, %v267
    %v279 = vmul.f32 %v38, %v271
    %v280 = vmul.f32 %v39, %v271
    %v281 = vadd.f32 %v249, %v273
    %v282 = vadd.f32 %v250, %v274
    %v283 = vadd.f32 %v251, %v275
    %v284 = vadd.f32 %v252, %v276
    %v285 = vadd.f32 %v253, %v277
    %v286 = vadd.f32 %v254, %v278
    %v287 = vadd.f32 %v255, %v279
    %v288 = vadd.f32 %v256, %v280
    %289 = vset.pattern.permute.xlu0 5
    %290 = vperm.xlu0 %289, %v40
    %v291 = vpop.permute.xlu0 %290
    %293 = vset.pattern.permute.xlu0 5
    %294 = vperm.xlu0 %293, %v41
    %v295 = vpop.permute.xlu0 %294
    %297 = vset.pattern.permute.xlu0 5
    %298 = vperm.xlu0 %297, %v42
    %v299 = vpop.permute.xlu0 %298
    %301 = vset.pattern.permute.xlu0 5
    %302 = vperm.xlu0 %301, %v43
    %v303 = vpop.permute.xlu0 %302
    %v305 = vmul.f32 %v133, %v291
    %v306 = vmul.f32 %v134, %v291
    %v307 = vmul.f32 %v135, %v295
    %v308 = vmul.f32 %v136, %v295
    %v309 = vmul.f32 %v137, %v299
    %v310 = vmul.f32 %v138, %v299
    %v311 = vmul.f32 %v139, %v303
    %v312 = vmul.f32 %v140, %v303
    %v313 = vadd.f32 %v281, %v305
    %v314 = vadd.f32 %v282, %v306
    %v315 = vadd.f32 %v283, %v307
    %v316 = vadd.f32 %v284, %v308
    %v317 = vadd.f32 %v285, %v309
    %v318 = vadd.f32 %v286, %v310
    %v319 = vadd.f32 %v287, %v311
    %v320 = vadd.f32 %v288, %v312
    %321 = vset.pattern.permute.xlu0 6
    %322 = vperm.xlu0 %321, %v40
    %v323 = vpop.permute.xlu0 %322
    %325 = vset.pattern.permute.xlu0 6
    %326 = vperm.xlu0 %325, %v41
    %v327 = vpop.permute.xlu0 %326
    %329 = vset.pattern.permute.xlu0 6
    %330 = vperm.xlu0 %329, %v42
    %v331 = vpop.permute.xlu0 %330
    %333 = vset.pattern.permute.xlu0 6
    %334 = vperm.xlu0 %333, %v43
    %v335 = vpop.permute.xlu0 %334
    %v337 = vmul.f32 %v89, %v323
    %v338 = vmul.f32 %v90, %v323
    %v339 = vmul.f32 %v91, %v327
    %v340 = vmul.f32 %v92, %v327
    %v341 = vmul.f32 %v93, %v331
    %v342 = vmul.f32 %v94, %v331
    %v343 = vmul.f32 %v95, %v335
    %v344 = vmul.f32 %v96, %v335
    %345 = vset.pattern.permute.xlu0 7
    %346 = vperm.xlu0 %345, %v40
    %v347 = vpop.permute.xlu0 %346
    %349 = vset.pattern.permute.xlu0 7
    %350 = vperm.xlu0 %349, %v41
    %v351 = vpop.permute.xlu0 %350
    %353 = vset.pattern.permute.xlu0 7
    %354 = vperm.xlu0 %353, %v42
    %v355 = vpop.permute.xlu0 %354
    %357 = vset.pattern.permute.xlu0 7
    %358 = vperm.xlu0 %357, %v43
    %v359 = vpop.permute.xlu0 %358
    %v361 = vmul.f32 %v32, %v347
    %v362 = vmul.f32 %v33, %v347
    %v363 = vmul.f32 %v34, %v351
    %v364 = vmul.f32 %v35, %v351
    %v365 = vmul.f32 %v36, %v355
    %v366 = vmul.f32 %v37, %v355
    %v367 = vmul.f32 %v38, %v359
    %v368 = vmul.f32 %v39, %v359
    %v369 = vadd.f32 %v337, %v361
    %v370 = vadd.f32 %v338, %v362
    %v371 = vadd.f32 %v339, %v363
    %v372 = vadd.f32 %v340, %v364
    %v373 = vadd.f32 %v341, %v365
    %v374 = vadd.f32 %v342, %v366
    %v375 = vadd.f32 %v343, %v367
    %v376 = vadd.f32 %v344, %v368
    %377 = vset.pattern.permute.xlu0 8
    %378 = vperm.xlu0 %377, %v40
    %v379 = vpop.permute.xlu0 %378
    %381 = vset.pattern.permute.xlu0 8
    %382 = vperm.xlu0 %381, %v41
    %v383 = vpop.permute.xlu0 %382
    %385 = vset.pattern.permute.xlu0 8
    %386 = vperm.xlu0 %385, %v42
    %v387 = vpop.permute.xlu0 %386
    %389 = vset.pattern.permute.xlu0 8
    %390 = vperm.xlu0 %389, %v43
    %v391 = vpop.permute.xlu0 %390
    %v393 = vmul.f32 %v133, %v379
    %v394 = vmul.f32 %v134, %v379
    %v395 = vmul.f32 %v135, %v383
    %v396 = vmul.f32 %v136, %v383
    %v397 = vmul.f32 %v137, %v387
    %v398 = vmul.f32 %v138, %v387
    %v399 = vmul.f32 %v139, %v391
    %v400 = vmul.f32 %v140, %v391
    %v401 = vadd.f32 %v369, %v393
    %v402 = vadd.f32 %v370, %v394
    %v403 = vadd.f32 %v371, %v395
    %v404 = vadd.f32 %v372, %v396
    %v405 = vadd.f32 %v373, %v397
    %v406 = vadd.f32 %v374, %v398
    %v407 = vadd.f32 %v375, %v399
    %v408 = vadd.f32 %v376, %v400
    %409 = vset.pattern.permute.xlu0 9
    %410 = vperm.xlu0 %409, %v40
    %v411 = vpop.permute.xlu0 %410
    %413 = vset.pattern.permute.xlu0 9
    %414 = vperm.xlu0 %413, %v41
    %v415 = vpop.permute.xlu0 %414
    %417 = vset.pattern.permute.xlu0 9
    %418 = vperm.xlu0 %417, %v42
    %v419 = vpop.permute.xlu0 %418
    %421 = vset.pattern.permute.xlu0 9
    %422 = vperm.xlu0 %421, %v43
    %v423 = vpop.permute.xlu0 %422
    %v425 = vadd.f32 %v313, %v411
    %v426 = vadd.f32 %v314, %v411
    %v427 = vadd.f32 %v315, %v415
    %v428 = vadd.f32 %v316, %v415
    %v429 = vadd.f32 %v317, %v419
    %v430 = vadd.f32 %v318, %v419
    %v431 = vadd.f32 %v319, %v423
    %v432 = vadd.f32 %v320, %v423
    %433 = vrot.lane.b32.xlu0 %v225, 16
    %v434 = vpop.permute.xlu0 %433
    %435 = vrot.lane.b32.xlu0 %v227, 16
    %v436 = vpop.permute.xlu0 %435
    %437 = vrot.lane.b32.xlu0 %v229, 16
    %v438 = vpop.permute.xlu0 %437
    %439 = vrot.lane.b32.xlu0 %v231, 16
    %v440 = vpop.permute.xlu0 %439
    %441 = vrot.lane.b32.xlu0 %v226, 16
    %v442 = vpop.permute.xlu0 %441
    %443 = vrot.lane.b32.xlu0 %v228, 16
    %v444 = vpop.permute.xlu0 %443
    %445 = vrot.lane.b32.xlu0 %v230, 16
    %v446 = vpop.permute.xlu0 %445
    %447 = vrot.lane.b32.xlu0 %v232, 16
    %v448 = vpop.permute.xlu0 %447
    %vm449 = vcmp.lt.s32.totalorder %v68, 16
    %v450 = vsel %vm449, %v434, %v442
    %v451 = vsel %vm449, %v436, %v444
    %v452 = vsel %vm449, %v438, %v446
    %v453 = vsel %vm449, %v440, %v448
    %v454 = vsel %vm449, %v442, %v434
    %v455 = vsel %vm449, %v444, %v436
    %v456 = vsel %vm449, %v446, %v438
    %v457 = vsel %vm449, %v448, %v440
    %v459 = vlaneseq
    %v460 = vshrl.u32 %v459, 7
    %v461 = vsub.s32 0, %v460
    %v462 = vrot.slane %v48, %v461
    %v463 = vlaneseq
    %v464 = vshrl.u32 %v463, 7
    %v465 = vsub.s32 1, %v464
    %v466 = vrot.slane %v48, %v465
    %v469 = vmul.f32 %v454, %v462
    %v470 = vmul.f32 %v450, %v466
    %v471 = vmul.f32 %v455, %v462
    %v472 = vmul.f32 %v451, %v466
    %v473 = vmul.f32 %v456, %v462
    %v474 = vmul.f32 %v452, %v466
    %v475 = vmul.f32 %v457, %v462
    %v476 = vmul.f32 %v453, %v466
    %v477 = vadd.f32 %v425, %v469
    %v478 = vadd.f32 %v426, %v470
    %v479 = vadd.f32 %v427, %v471
    %v480 = vadd.f32 %v428, %v472
    %v481 = vadd.f32 %v429, %v473
    %v482 = vadd.f32 %v430, %v474
    %v483 = vadd.f32 %v431, %v475
    %v484 = vadd.f32 %v432, %v476
    %485 = vrot.lane.b32.xlu0 %v401, 112
    %v486 = vpop.permute.xlu0 %485
    %487 = vrot.lane.b32.xlu0 %v403, 112
    %v488 = vpop.permute.xlu0 %487
    %489 = vrot.lane.b32.xlu0 %v405, 112
    %v490 = vpop.permute.xlu0 %489
    %491 = vrot.lane.b32.xlu0 %v407, 112
    %v492 = vpop.permute.xlu0 %491
    %493 = vrot.lane.b32.xlu0 %v402, 112
    %v494 = vpop.permute.xlu0 %493
    %495 = vrot.lane.b32.xlu0 %v404, 112
    %v496 = vpop.permute.xlu0 %495
    %497 = vrot.lane.b32.xlu0 %v406, 112
    %v498 = vpop.permute.xlu0 %497
    %499 = vrot.lane.b32.xlu0 %v408, 112
    %v500 = vpop.permute.xlu0 %499
    %vm501 = vcmp.lt.s32.totalorder %v68, 112
    %v502 = vsel %vm501, %v486, %v494
    %v503 = vsel %vm501, %v488, %v496
    %v504 = vsel %vm501, %v490, %v498
    %v505 = vsel %vm501, %v492, %v500
    %v506 = vsel %vm501, %v494, %v486
    %v507 = vsel %vm501, %v496, %v488
    %v508 = vsel %vm501, %v498, %v490
    %v509 = vsel %vm501, %v500, %v492
    %v511 = vlaneseq
    %v512 = vshrl.u32 %v511, 7
    %v513 = vsub.s32 0, %v512
    %v514 = vrot.slane %v50, %v513
    %v515 = vlaneseq
    %v516 = vshrl.u32 %v515, 7
    %v517 = vsub.s32 1, %v516
    %v518 = vrot.slane %v50, %v517
    %v521 = vmul.f32 %v502, %v514
    %v522 = vmul.f32 %v506, %v518
    %v523 = vmul.f32 %v503, %v514
    %v524 = vmul.f32 %v507, %v518
    %v525 = vmul.f32 %v504, %v514
    %v526 = vmul.f32 %v508, %v518
    %v527 = vmul.f32 %v505, %v514
    %v528 = vmul.f32 %v509, %v518
    %v529 = vadd.f32 %v477, %v521
    %v530 = vadd.f32 %v478, %v522
    %v531 = vadd.f32 %v479, %v523
    %v532 = vadd.f32 %v480, %v524
    %v533 = vadd.f32 %v481, %v525
    %v534 = vadd.f32 %v482, %v526
    %v535 = vadd.f32 %v483, %v527
    %v536 = vadd.f32 %v484, %v528
    %v537 = vmul.f32 %v529, 0.5
    %v538 = vmul.f32 %v530, 0.5
    %v539 = vmul.f32 %v531, 0.5
    %v540 = vmul.f32 %v532, 0.5
    %v541 = vmul.f32 %v533, 0.5
    %v542 = vmul.f32 %v534, 0.5
    %v543 = vmul.f32 %v535, 0.5
    %v544 = vmul.f32 %v536, 0.5
    %v545 = vmul.f32 %v529, 0.70710677
    %v546 = vmul.f32 %v530, 0.70710677
    %v547 = vmul.f32 %v531, 0.70710677
    %v548 = vmul.f32 %v532, 0.70710677
    %v549 = vmul.f32 %v533, 0.70710677
    %v550 = vmul.f32 %v534, 0.70710677
    %v551 = vmul.f32 %v535, 0.70710677
    %v552 = vmul.f32 %v536, 0.70710677
    %v553 = vand.u32 2147483647, %v545
    %v554 = vand.u32 2147483647, %v546
    %v555 = vand.u32 2147483647, %v547
    %v556 = vand.u32 2147483647, %v548
    %v557 = vand.u32 2147483647, %v549
    %v558 = vand.u32 2147483647, %v550
    %v559 = vand.u32 2147483647, %v551
    %v560 = vand.u32 2147483647, %v552
    %v561 = vmul.f32 %v553, 0.5
    %v562 = vmul.f32 %v554, 0.5
    %v563 = vmul.f32 %v555, 0.5
    %v564 = vmul.f32 %v556, 0.5
    %v565 = vmul.f32 %v557, 0.5
    %v566 = vmul.f32 %v558, 0.5
    %v567 = vmul.f32 %v559, 0.5
    %v568 = vmul.f32 %v560, 0.5
    %v569 = vadd.f32 %v561, 1.0
    %v570 = vadd.f32 %v562, 1.0
    %v571 = vadd.f32 %v563, 1.0
    %v572 = vadd.f32 %v564, 1.0
    %v573 = vadd.f32 %v565, 1.0
    %v574 = vadd.f32 %v566, 1.0
    %v575 = vadd.f32 %v567, 1.0
    %v576 = vadd.f32 %v568, 1.0
    %v577 = vrcp.pop %v569
    %v578 = vrcp.pop %v570
    %v579 = vrcp.pop %v571
    %v580 = vrcp.pop %v572
    %v581 = vrcp.pop %v573
    %v582 = vrcp.pop %v574
    %v583 = vrcp.pop %v575
    %v584 = vrcp.pop %v576
    %v585 = vmul.f32 %v569, %v577
    %v586 = vmul.f32 %v570, %v578
    %v587 = vmul.f32 %v571, %v579
    %v588 = vmul.f32 %v572, %v580
    %v589 = vmul.f32 %v573, %v581
    %v590 = vmul.f32 %v574, %v582
    %v591 = vmul.f32 %v575, %v583
    %v592 = vmul.f32 %v576, %v584
    %v593 = vsub.f32 2.0, %v585
    %v594 = vsub.f32 2.0, %v586
    %v595 = vsub.f32 2.0, %v587
    %v596 = vsub.f32 2.0, %v588
    %v597 = vsub.f32 2.0, %v589
    %v598 = vsub.f32 2.0, %v590
    %v599 = vsub.f32 2.0, %v591
    %v600 = vsub.f32 2.0, %v592
    %v601 = vmul.f32 %v577, %v593
    %v602 = vmul.f32 %v578, %v594
    %v603 = vmul.f32 %v579, %v595
    %v604 = vmul.f32 %v580, %v596
    %v605 = vmul.f32 %v581, %v597
    %v606 = vmul.f32 %v582, %v598
    %v607 = vmul.f32 %v583, %v599
    %v608 = vmul.f32 %v584, %v600
    %v609 = vsub.f32 0.0, %v553
    %v610 = vsub.f32 0.0, %v554
    %v611 = vsub.f32 0.0, %v555
    %v612 = vsub.f32 0.0, %v556
    %v613 = vsub.f32 0.0, %v557
    %v614 = vsub.f32 0.0, %v558
    %v615 = vsub.f32 0.0, %v559
    %v616 = vsub.f32 0.0, %v560
    %v617 = vmul.f32 %v609, %v553
    %v618 = vmul.f32 %v610, %v554
    %v619 = vmul.f32 %v611, %v555
    %v620 = vmul.f32 %v612, %v556
    %v621 = vmul.f32 %v613, %v557
    %v622 = vmul.f32 %v614, %v558
    %v623 = vmul.f32 %v615, %v559
    %v624 = vmul.f32 %v616, %v560
    %v625 = vmul.f32 %v601, 0.17087276
    %v626 = vmul.f32 %v602, 0.17087276
    %v627 = vmul.f32 %v603, 0.17087276
    %v628 = vmul.f32 %v604, 0.17087276
    %v629 = vmul.f32 %v605, 0.17087276
    %v630 = vmul.f32 %v606, 0.17087276
    %v631 = vmul.f32 %v607, 0.17087276
    %v632 = vmul.f32 %v608, 0.17087276
    %v633 = vadd.f32 %v625, -0.82215226
    %v634 = vadd.f32 %v626, -0.82215226
    %v635 = vadd.f32 %v627, -0.82215226
    %v636 = vadd.f32 %v628, -0.82215226
    %v637 = vadd.f32 %v629, -0.82215226
    %v638 = vadd.f32 %v630, -0.82215226
    %v639 = vadd.f32 %v631, -0.82215226
    %v640 = vadd.f32 %v632, -0.82215226
    %v641 = vmul.f32 %v601, %v633
    %v642 = vmul.f32 %v602, %v634
    %v643 = vmul.f32 %v603, %v635
    %v644 = vmul.f32 %v604, %v636
    %v645 = vmul.f32 %v605, %v637
    %v646 = vmul.f32 %v606, %v638
    %v647 = vmul.f32 %v607, %v639
    %v648 = vmul.f32 %v608, %v640
    %v649 = vadd.f32 %v641, 1.4885159
    %v650 = vadd.f32 %v642, 1.4885159
    %v651 = vadd.f32 %v643, 1.4885159
    %v652 = vadd.f32 %v644, 1.4885159
    %v653 = vadd.f32 %v645, 1.4885159
    %v654 = vadd.f32 %v646, 1.4885159
    %v655 = vadd.f32 %v647, 1.4885159
    %v656 = vadd.f32 %v648, 1.4885159
    %v657 = vmul.f32 %v601, %v649
    %v658 = vmul.f32 %v602, %v650
    %v659 = vmul.f32 %v603, %v651
    %v660 = vmul.f32 %v604, %v652
    %v661 = vmul.f32 %v605, %v653
    %v662 = vmul.f32 %v606, %v654
    %v663 = vmul.f32 %v607, %v655
    %v664 = vmul.f32 %v608, %v656
    %v665 = vadd.f32 %v657, -1.135204
    %v666 = vadd.f32 %v658, -1.135204
    %v667 = vadd.f32 %v659, -1.135204
    %v668 = vadd.f32 %v660, -1.135204
    %v669 = vadd.f32 %v661, -1.135204
    %v670 = vadd.f32 %v662, -1.135204
    %v671 = vadd.f32 %v663, -1.135204
    %v672 = vadd.f32 %v664, -1.135204
    %v673 = vmul.f32 %v601, %v665
    %v674 = vmul.f32 %v602, %v666
    %v675 = vmul.f32 %v603, %v667
    %v676 = vmul.f32 %v604, %v668
    %v677 = vmul.f32 %v605, %v669
    %v678 = vmul.f32 %v606, %v670
    %v679 = vmul.f32 %v607, %v671
    %v680 = vmul.f32 %v608, %v672
    %v681 = vadd.f32 %v673, 0.27886808
    %v682 = vadd.f32 %v674, 0.27886808
    %v683 = vadd.f32 %v675, 0.27886808
    %v684 = vadd.f32 %v676, 0.27886808
    %v685 = vadd.f32 %v677, 0.27886808
    %v686 = vadd.f32 %v678, 0.27886808
    %v687 = vadd.f32 %v679, 0.27886808
    %v688 = vadd.f32 %v680, 0.27886808
    %v689 = vmul.f32 %v601, %v681
    %v690 = vmul.f32 %v602, %v682
    %v691 = vmul.f32 %v603, %v683
    %v692 = vmul.f32 %v604, %v684
    %v693 = vmul.f32 %v605, %v685
    %v694 = vmul.f32 %v606, %v686
    %v695 = vmul.f32 %v607, %v687
    %v696 = vmul.f32 %v608, %v688
    %v697 = vadd.f32 %v689, -0.18628806
    %v698 = vadd.f32 %v690, -0.18628806
    %v699 = vadd.f32 %v691, -0.18628806
    %v700 = vadd.f32 %v692, -0.18628806
    %v701 = vadd.f32 %v693, -0.18628806
    %v702 = vadd.f32 %v694, -0.18628806
    %v703 = vadd.f32 %v695, -0.18628806
    %v704 = vadd.f32 %v696, -0.18628806
    %v705 = vmul.f32 %v601, %v697
    %v706 = vmul.f32 %v602, %v698
    %v707 = vmul.f32 %v603, %v699
    %v708 = vmul.f32 %v604, %v700
    %v709 = vmul.f32 %v605, %v701
    %v710 = vmul.f32 %v606, %v702
    %v711 = vmul.f32 %v607, %v703
    %v712 = vmul.f32 %v608, %v704
    %v713 = vadd.f32 %v705, 0.09678418
    %v714 = vadd.f32 %v706, 0.09678418
    %v715 = vadd.f32 %v707, 0.09678418
    %v716 = vadd.f32 %v708, 0.09678418
    %v717 = vadd.f32 %v709, 0.09678418
    %v718 = vadd.f32 %v710, 0.09678418
    %v719 = vadd.f32 %v711, 0.09678418
    %v720 = vadd.f32 %v712, 0.09678418
    %v721 = vmul.f32 %v601, %v713
    %v722 = vmul.f32 %v602, %v714
    %v723 = vmul.f32 %v603, %v715
    %v724 = vmul.f32 %v604, %v716
    %v725 = vmul.f32 %v605, %v717
    %v726 = vmul.f32 %v606, %v718
    %v727 = vmul.f32 %v607, %v719
    %v728 = vmul.f32 %v608, %v720
    %v729 = vadd.f32 %v721, 0.37409195
    %v730 = vadd.f32 %v722, 0.37409195
    %v731 = vadd.f32 %v723, 0.37409195
    %v732 = vadd.f32 %v724, 0.37409195
    %v733 = vadd.f32 %v725, 0.37409195
    %v734 = vadd.f32 %v726, 0.37409195
    %v735 = vadd.f32 %v727, 0.37409195
    %v736 = vadd.f32 %v728, 0.37409195
    %v737 = vmul.f32 %v601, %v729
    %v738 = vmul.f32 %v602, %v730
    %v739 = vmul.f32 %v603, %v731
    %v740 = vmul.f32 %v604, %v732
    %v741 = vmul.f32 %v605, %v733
    %v742 = vmul.f32 %v606, %v734
    %v743 = vmul.f32 %v607, %v735
    %v744 = vmul.f32 %v608, %v736
    %v745 = vadd.f32 %v737, 1.0000237
    %v746 = vadd.f32 %v738, 1.0000237
    %v747 = vadd.f32 %v739, 1.0000237
    %v748 = vadd.f32 %v740, 1.0000237
    %v749 = vadd.f32 %v741, 1.0000237
    %v750 = vadd.f32 %v742, 1.0000237
    %v751 = vadd.f32 %v743, 1.0000237
    %v752 = vadd.f32 %v744, 1.0000237
    %v753 = vmul.f32 %v601, %v745
    %v754 = vmul.f32 %v602, %v746
    %v755 = vmul.f32 %v603, %v747
    %v756 = vmul.f32 %v604, %v748
    %v757 = vmul.f32 %v605, %v749
    %v758 = vmul.f32 %v606, %v750
    %v759 = vmul.f32 %v607, %v751
    %v760 = vmul.f32 %v608, %v752
    %v761 = vadd.f32 %v753, -1.2655122
    %v762 = vadd.f32 %v754, -1.2655122
    %v763 = vadd.f32 %v755, -1.2655122
    %v764 = vadd.f32 %v756, -1.2655122
    %v765 = vadd.f32 %v757, -1.2655122
    %v766 = vadd.f32 %v758, -1.2655122
    %v767 = vadd.f32 %v759, -1.2655122
    %v768 = vadd.f32 %v760, -1.2655122
    %v769 = vadd.f32 %v617, %v761
    %v770 = vadd.f32 %v618, %v762
    %v771 = vadd.f32 %v619, %v763
    %v772 = vadd.f32 %v620, %v764
    %v773 = vadd.f32 %v621, %v765
    %v774 = vadd.f32 %v622, %v766
    %v775 = vadd.f32 %v623, %v767
    %v776 = vadd.f32 %v624, %v768
    %v777 = vmul.f32 %v769, 1.442695
    %v778 = vpow.pop %v777
    %v779 = vmul.f32 %v770, 1.442695
    %v780 = vpow.pop %v779
    %v781 = vmul.f32 %v771, 1.442695
    %v782 = vpow.pop %v781
    %v783 = vmul.f32 %v772, 1.442695
    %v784 = vpow.pop %v783
    %v785 = vmul.f32 %v773, 1.442695
    %v786 = vpow.pop %v785
    %v787 = vmul.f32 %v774, 1.442695
    %v788 = vpow.pop %v787
    %v789 = vmul.f32 %v775, 1.442695
    %v790 = vpow.pop %v789
    %v791 = vmul.f32 %v776, 1.442695
    %v792 = vpow.pop %v791
    %v793 = vmul.f32 %v601, %v778
    %v794 = vmul.f32 %v602, %v780
    %v795 = vmul.f32 %v603, %v782
    %v796 = vmul.f32 %v604, %v784
    %v797 = vmul.f32 %v605, %v786
    %v798 = vmul.f32 %v606, %v788
    %v799 = vmul.f32 %v607, %v790
    %v800 = vmul.f32 %v608, %v792
    %vm801 = vcmp.ge.f32.partialorder %v545, 0.0
    %vm802 = vcmp.ge.f32.partialorder %v546, 0.0
    %vm803 = vcmp.ge.f32.partialorder %v547, 0.0
    %vm804 = vcmp.ge.f32.partialorder %v548, 0.0
    %vm805 = vcmp.ge.f32.partialorder %v549, 0.0
    %vm806 = vcmp.ge.f32.partialorder %v550, 0.0
    %vm807 = vcmp.ge.f32.partialorder %v551, 0.0
    %vm808 = vcmp.ge.f32.partialorder %v552, 0.0
    %v809 = vsub.f32 1.0, %v793
    %v810 = vsub.f32 1.0, %v794
    %v811 = vsub.f32 1.0, %v795
    %v812 = vsub.f32 1.0, %v796
    %v813 = vsub.f32 1.0, %v797
    %v814 = vsub.f32 1.0, %v798
    %v815 = vsub.f32 1.0, %v799
    %v816 = vsub.f32 1.0, %v800
    %v817 = vsub.f32 %v793, 1.0
    %v818 = vsub.f32 %v794, 1.0
    %v819 = vsub.f32 %v795, 1.0
    %v820 = vsub.f32 %v796, 1.0
    %v821 = vsub.f32 %v797, 1.0
    %v822 = vsub.f32 %v798, 1.0
    %v823 = vsub.f32 %v799, 1.0
    %v824 = vsub.f32 %v800, 1.0
    %v825 = vsel %vm801, %v809, %v817
    %v826 = vsel %vm802, %v810, %v818
    %v827 = vsel %vm803, %v811, %v819
    %v828 = vsel %vm804, %v812, %v820
    %v829 = vsel %vm805, %v813, %v821
    %v830 = vsel %vm806, %v814, %v822
    %v831 = vsel %vm807, %v815, %v823
    %v832 = vsel %vm808, %v816, %v824
    %v833 = vadd.f32 %v825, 1.0
    %v834 = vadd.f32 %v826, 1.0
    %v835 = vadd.f32 %v827, 1.0
    %v836 = vadd.f32 %v828, 1.0
    %v837 = vadd.f32 %v829, 1.0
    %v838 = vadd.f32 %v830, 1.0
    %v839 = vadd.f32 %v831, 1.0
    %v840 = vadd.f32 %v832, 1.0
    %v841 = vmul.f32 %v537, %v833
    %v842 = vmul.f32 %v538, %v834
    %v843 = vmul.f32 %v539, %v835
    %v844 = vmul.f32 %v540, %v836
    %v845 = vmul.f32 %v541, %v837
    %v846 = vmul.f32 %v542, %v838
    %v847 = vmul.f32 %v543, %v839
    %v848 = vmul.f32 %v544, %v840
    %v849 = vadd.f32 %v841, %v842
    %850 = vadd.xlane.f32.xlu0 %v849
    %v851 = vpop.xlane.xlu0 %850
    %v852 = vadd.f32 %v843, %v844
    %853 = vadd.xlane.f32.xlu0 %v852
    %v854 = vpop.xlane.xlu0 %853
    %v855 = vadd.f32 %v845, %v846
    %856 = vadd.xlane.f32.xlu0 %v855
    %v857 = vpop.xlane.xlu0 %856
    %v858 = vadd.f32 %v847, %v848
    %859 = vadd.xlane.f32.xlu0 %v858
    %v860 = vpop.xlane.xlu0 %859
    %v861 = vmul.f32 %v851, 0.00390625
    %v862 = vmul.f32 %v854, 0.00390625
    %v863 = vmul.f32 %v857, 0.00390625
    %v864 = vmul.f32 %v860, 0.00390625
    %v865 = vmul.f32 %v841, %v841
    %v866 = vmul.f32 %v842, %v842
    %v867 = vmul.f32 %v843, %v843
    %v868 = vmul.f32 %v844, %v844
    %v869 = vmul.f32 %v845, %v845
    %v870 = vmul.f32 %v846, %v846
    %v871 = vmul.f32 %v847, %v847
    %v872 = vmul.f32 %v848, %v848
    %v873 = vadd.f32 %v865, %v866
    %874 = vadd.xlane.f32.xlu0 %v873
    %v875 = vpop.xlane.xlu0 %874
    %v876 = vadd.f32 %v867, %v868
    %877 = vadd.xlane.f32.xlu0 %v876
    %v878 = vpop.xlane.xlu0 %877
    %v879 = vadd.f32 %v869, %v870
    %880 = vadd.xlane.f32.xlu0 %v879
    %v881 = vpop.xlane.xlu0 %880
    %v882 = vadd.f32 %v871, %v872
    %883 = vadd.xlane.f32.xlu0 %v882
    %v884 = vpop.xlane.xlu0 %883
    %v885 = vmul.f32 %v875, 0.00390625
    %v886 = vmul.f32 %v878, 0.00390625
    %v887 = vmul.f32 %v881, 0.00390625
    %v888 = vmul.f32 %v884, 0.00390625
    %v889 = vmul.f32 %v861, %v861
    %v890 = vmul.f32 %v862, %v862
    %v891 = vmul.f32 %v863, %v863
    %v892 = vmul.f32 %v864, %v864
    %v893 = vsub.f32 %v885, %v889
    %v894 = vsub.f32 %v886, %v890
    %v895 = vsub.f32 %v887, %v891
    %v896 = vsub.f32 %v888, %v892
    %v897 = vmax.f32 %v893, 0.0
    %v898 = vmax.f32 %v894, 0.0
    %v899 = vmax.f32 %v895, 0.0
    %v900 = vmax.f32 %v896, 0.0
    %v901 = vsub.f32 %v841, %v861
    %v902 = vsub.f32 %v842, %v861
    %v903 = vsub.f32 %v843, %v862
    %v904 = vsub.f32 %v844, %v862
    %v905 = vsub.f32 %v845, %v863
    %v906 = vsub.f32 %v846, %v863
    %v907 = vsub.f32 %v847, %v864
    %v908 = vsub.f32 %v848, %v864
    %v909 = vadd.f32 %v897, 1e-05
    %v910 = vadd.f32 %v898, 1e-05
    %v911 = vadd.f32 %v899, 1e-05
    %v912 = vadd.f32 %v900, 1e-05
    %v913 = vrsqrt.pop %v909
    %v914 = vrsqrt.pop %v910
    %v915 = vrsqrt.pop %v911
    %v916 = vrsqrt.pop %v912
    %v917 = vmul.f32 %v913, %v40
    %v918 = vmul.f32 %v914, %v41
    %v919 = vmul.f32 %v915, %v42
    %v920 = vmul.f32 %v916, %v43
    %922 = vset.pattern.permute.xlu0 10
    %923 = vperm.xlu0 %922, %v917
    %v924 = vpop.permute.xlu0 %923
    %927 = vset.pattern.permute.xlu0 10
    %928 = vperm.xlu0 %927, %v918
    %v929 = vpop.permute.xlu0 %928
    %932 = vset.pattern.permute.xlu0 10
    %933 = vperm.xlu0 %932, %v919
    %v934 = vpop.permute.xlu0 %933
    %937 = vset.pattern.permute.xlu0 10
    %938 = vperm.xlu0 %937, %v920
    %v939 = vpop.permute.xlu0 %938
    %v941 = vmul.f32 %v901, %v924
    %v942 = vmul.f32 %v902, %v924
    %v943 = vmul.f32 %v903, %v929
    %v944 = vmul.f32 %v904, %v929
    %v945 = vmul.f32 %v905, %v934
    %v946 = vmul.f32 %v906, %v934
    %v947 = vmul.f32 %v907, %v939
    %v948 = vmul.f32 %v908, %v939
    %949 = vset.pattern.permute.xlu0 11
    %950 = vperm.xlu0 %949, %v40
    %v951 = vpop.permute.xlu0 %950
    %953 = vset.pattern.permute.xlu0 11
    %954 = vperm.xlu0 %953, %v41
    %v955 = vpop.permute.xlu0 %954
    %957 = vset.pattern.permute.xlu0 11
    %958 = vperm.xlu0 %957, %v42
    %v959 = vpop.permute.xlu0 %958
    %961 = vset.pattern.permute.xlu0 11
    %962 = vperm.xlu0 %961, %v43
    %v963 = vpop.permute.xlu0 %962
    %v965 = vadd.f32 %v941, %v951
    %v966 = vadd.f32 %v942, %v951
    %v967 = vadd.f32 %v943, %v955
    %v968 = vadd.f32 %v944, %v955
    %v969 = vadd.f32 %v945, %v959
    %v970 = vadd.f32 %v946, %v959
    %v971 = vadd.f32 %v947, %v963
    %v972 = vadd.f32 %v948, %v963
    %v973 = vld [vmem:[%s2] sm:$0xff]
    %v974 = vld [vmem:[%s2 + $0x8] sm:$0xff]
    %v975 = vld [vmem:[%s2 + $0x10] sm:$0xff]
    %v976 = vld [vmem:[%s2 + $0x18] sm:$0xff]
    %977 = vset.pattern.permute.xlu0 12
    %978 = vperm.xlu0 %977, %v40
    %v979 = vpop.permute.xlu0 %978
    %981 = vset.pattern.permute.xlu0 12
    %982 = vperm.xlu0 %981, %v41
    %v983 = vpop.permute.xlu0 %982
    %985 = vset.pattern.permute.xlu0 12
    %986 = vperm.xlu0 %985, %v42
    %v987 = vpop.permute.xlu0 %986
    %989 = vset.pattern.permute.xlu0 12
    %990 = vperm.xlu0 %989, %v43
    %v991 = vpop.permute.xlu0 %990
    %vm993 = vcmask 261120
    %v995 = vsel %vm993, %v973, 0
    %v998 = vsel %vm993, %v974, 0
    %v1001 = vsel %vm993, %v975, 0
    %v1004 = vsel %vm993, %v976, 0
    %1006 = vmatprep.subr.mxu0 %v966
    %1007 = vmatpush1.msra.mxu0 %v965
    %1008 = vmatprep.subr.mxu0 %v968
    %1009 = vmatpush1.msra.mxu0 %v967
    %1010 = vmatprep.subr.mxu0 %v970
    %1011 = vmatpush1.msra.mxu0 %v969
    %1012 = vmatprep.subr.mxu0 %v972
    %1013 = vmatpush1.msra.mxu0 %v971
    %1014 = vmatprep.subr.mxu0 0.0
    %1015 = vmatpush1.msra.mxu0 0.0
    %1016 = vmatprep.subr.mxu0 0.0
    %1017 = vmatpush1.msra.mxu0 0.0
    %1018 = vmatprep.subr.mxu0 0.0
    %1019 = vmatpush1.msra.mxu0 0.0
    %1020 = vmatprep.subr.mxu0 0.0
    %1021 = vmatpush1.msra.mxu0 0.0
    %1022 = vmatprep.subr.mxu0 0.0
    %1023 = vmatpush1.msra.mxu0 0.0
    %1024 = vmatprep.subr.mxu0 0.0
    %1025 = vmatpush1.msra.mxu0 0.0
    %1026 = vmatprep.subr.mxu0 0.0
    %1027 = vmatpush1.msra.mxu0 0.0
    %1028 = vmatprep.subr.mxu0 0.0
    %1029 = vmatpush1.msra.mxu0 0.0
    %1030 = vmatprep.subr.mxu0 0.0
    %1031 = vmatpush1.msra.mxu0 0.0
    %1032 = vmatprep.subr.mxu0 0.0
    %1033 = vmatpush1.msra.mxu0 0.0
    %1034 = vmatprep.subr.mxu0 0.0
    %1035 = vmatpush1.msra.mxu0 0.0
    %1036 = vmatprep.subr.mxu0 0.0
    %1037 = vmatpush1.msra.mxu0 0.0
    %1038 = vmatprep.subr.mxu0 0.0
    %1039 = vmatpush1.msra.mxu0 0.0
    %1040 = vmatprep.subr.mxu0 0.0
    %1041 = vmatpush1.msra.mxu0 0.0
    %1042 = vmatprep.subr.mxu0 0.0
    %1043 = vmatpush1.msra.mxu0 0.0
    %1044 = vmatprep.subr.mxu0 0.0
    %1045 = vmatpush1.msra.mxu0 0.0
    %1046 = vmatprep.subr.mxu0 0.0
    %1047 = vmatpush1.msra.mxu0 0.0
    %1048 = vmatprep.subr.mxu0 0.0
    %1049 = vmatpush1.msra.mxu0 0.0
    %1050 = vmatprep.subr.mxu0 0.0
    %1051 = vmatpush1.msra.mxu0 0.0
    %1052 = vmatprep.subr.mxu0 0.0
    %1053 = vmatpush1.msra.mxu0 0.0
    %1054 = vmatprep.subr.mxu0 0.0
    %1055 = vmatpush1.msra.mxu0 0.0
    %1056 = vmatprep.subr.mxu0 0.0
    %1057 = vmatpush1.msra.mxu0 0.0
    %1058 = vmatprep.subr.mxu0 0.0
    %1059 = vmatpush1.msra.mxu0 0.0
    %1060 = vmatprep.subr.mxu0 0.0
    %1061 = vmatpush1.msra.mxu0 0.0
    %1062 = vmatprep.subr.mxu0 0.0
    %1063 = vmatpush1.msra.mxu0 0.0
    %1064 = vmatprep.subr.mxu0 0.0
    %1065 = vmatpush1.msra.mxu0 0.0
    %1066 = vmatprep.subr.mxu0 0.0
    %1067 = vmatpush1.msra.mxu0 0.0
    %1068 = vmatprep.subr.mxu0 0.0
    %1069 = vmatpush1.msra.mxu0 0.0
    %1070 = vmatprep.mubr.f32.mxu0 0.0
    %1071 = vmatmul.mubr.f32.gmra.mrb[0].mxu0 %v995
    %v1072 = vpop.f32.mrb[0].mxu0
    %v1073 = vadd.f32 %v979, %v1072
    %v1074 = vpop.f32.mrb[0].mxu0
    %v1075 = vadd.f32 %v979, %v1074
    %1076 = vmatprep.mubr.f32.mxu0 0.0
    %1077 = vmatmul.mubr.f32.gmra.mrb[0].mxu0 %v998
    %v1078 = vpop.f32.mrb[0].mxu0
    %v1079 = vadd.f32 %v983, %v1078
    %v1080 = vpop.f32.mrb[0].mxu0
    %v1081 = vadd.f32 %v983, %v1080
    %1082 = vmatprep.mubr.f32.mxu0 0.0
    %1083 = vmatmul.mubr.f32.gmra.mrb[0].mxu0 %v1001
    %v1084 = vpop.f32.mrb[0].mxu0
    %v1085 = vadd.f32 %v987, %v1084
    %v1086 = vpop.f32.mrb[0].mxu0
    %v1087 = vadd.f32 %v987, %v1086
    %1088 = vmatprep.mubr.f32.mxu0 0.0
    %1089 = vmatmul.mubr.f32.gmra.mrb[0].mxu0 %v1004
    %v1090 = vpop.f32.mrb[0].mxu0
    %v1091 = vadd.f32 %v991, %v1090
    %v1092 = vpop.f32.mrb[0].mxu0
    %v1093 = vadd.f32 %v991, %v1092
    %1094 = vdwg.mxu0
    %v1095 = vmul.f32 %v1073, 0.5
    %v1096 = vmul.f32 %v1075, 0.5
    %v1097 = vmul.f32 %v1079, 0.5
    %v1098 = vmul.f32 %v1081, 0.5
    %v1099 = vmul.f32 %v1085, 0.5
    %v1100 = vmul.f32 %v1087, 0.5
    %v1101 = vmul.f32 %v1091, 0.5
    %v1102 = vmul.f32 %v1093, 0.5
    %v1103 = vmul.f32 %v1073, 0.70710677
    %v1104 = vmul.f32 %v1075, 0.70710677
    %v1105 = vmul.f32 %v1079, 0.70710677
    %v1106 = vmul.f32 %v1081, 0.70710677
    %v1107 = vmul.f32 %v1085, 0.70710677
    %v1108 = vmul.f32 %v1087, 0.70710677
    %v1109 = vmul.f32 %v1091, 0.70710677
    %v1110 = vmul.f32 %v1093, 0.70710677
    %v1111 = vand.u32 2147483647, %v1103
    %v1112 = vand.u32 2147483647, %v1104
    %v1113 = vand.u32 2147483647, %v1105
    %v1114 = vand.u32 2147483647, %v1106
    %v1115 = vand.u32 2147483647, %v1107
    %v1116 = vand.u32 2147483647, %v1108
    %v1117 = vand.u32 2147483647, %v1109
    %v1118 = vand.u32 2147483647, %v1110
    %v1119 = vmul.f32 %v1111, 0.5
    %v1120 = vmul.f32 %v1112, 0.5
    %v1121 = vmul.f32 %v1113, 0.5
    %v1122 = vmul.f32 %v1114, 0.5
    %v1123 = vmul.f32 %v1115, 0.5
    %v1124 = vmul.f32 %v1116, 0.5
    %v1125 = vmul.f32 %v1117, 0.5
    %v1126 = vmul.f32 %v1118, 0.5
    %v1127 = vadd.f32 %v1119, 1.0
    %v1128 = vadd.f32 %v1120, 1.0
    %v1129 = vadd.f32 %v1121, 1.0
    %v1130 = vadd.f32 %v1122, 1.0
    %v1131 = vadd.f32 %v1123, 1.0
    %v1132 = vadd.f32 %v1124, 1.0
    %v1133 = vadd.f32 %v1125, 1.0
    %v1134 = vadd.f32 %v1126, 1.0
    %v1135 = vrcp.pop %v1127
    %v1136 = vrcp.pop %v1128
    %v1137 = vrcp.pop %v1129
    %v1138 = vrcp.pop %v1130
    %v1139 = vrcp.pop %v1131
    %v1140 = vrcp.pop %v1132
    %v1141 = vrcp.pop %v1133
    %v1142 = vrcp.pop %v1134
    %v1143 = vmul.f32 %v1127, %v1135
    %v1144 = vmul.f32 %v1128, %v1136
    %v1145 = vmul.f32 %v1129, %v1137
    %v1146 = vmul.f32 %v1130, %v1138
    %v1147 = vmul.f32 %v1131, %v1139
    %v1148 = vmul.f32 %v1132, %v1140
    %v1149 = vmul.f32 %v1133, %v1141
    %v1150 = vmul.f32 %v1134, %v1142
    %v1151 = vsub.f32 2.0, %v1143
    %v1152 = vsub.f32 2.0, %v1144
    %v1153 = vsub.f32 2.0, %v1145
    %v1154 = vsub.f32 2.0, %v1146
    %v1155 = vsub.f32 2.0, %v1147
    %v1156 = vsub.f32 2.0, %v1148
    %v1157 = vsub.f32 2.0, %v1149
    %v1158 = vsub.f32 2.0, %v1150
    %v1159 = vmul.f32 %v1135, %v1151
    %v1160 = vmul.f32 %v1136, %v1152
    %v1161 = vmul.f32 %v1137, %v1153
    %v1162 = vmul.f32 %v1138, %v1154
    %v1163 = vmul.f32 %v1139, %v1155
    %v1164 = vmul.f32 %v1140, %v1156
    %v1165 = vmul.f32 %v1141, %v1157
    %v1166 = vmul.f32 %v1142, %v1158
    %v1167 = vsub.f32 0.0, %v1111
    %v1168 = vsub.f32 0.0, %v1112
    %v1169 = vsub.f32 0.0, %v1113
    %v1170 = vsub.f32 0.0, %v1114
    %v1171 = vsub.f32 0.0, %v1115
    %v1172 = vsub.f32 0.0, %v1116
    %v1173 = vsub.f32 0.0, %v1117
    %v1174 = vsub.f32 0.0, %v1118
    %v1175 = vmul.f32 %v1167, %v1111
    %v1176 = vmul.f32 %v1168, %v1112
    %v1177 = vmul.f32 %v1169, %v1113
    %v1178 = vmul.f32 %v1170, %v1114
    %v1179 = vmul.f32 %v1171, %v1115
    %v1180 = vmul.f32 %v1172, %v1116
    %v1181 = vmul.f32 %v1173, %v1117
    %v1182 = vmul.f32 %v1174, %v1118
    %v1183 = vmul.f32 %v1159, 0.17087276
    %v1184 = vmul.f32 %v1160, 0.17087276
    %v1185 = vmul.f32 %v1161, 0.17087276
    %v1186 = vmul.f32 %v1162, 0.17087276
    %v1187 = vmul.f32 %v1163, 0.17087276
    %v1188 = vmul.f32 %v1164, 0.17087276
    %v1189 = vmul.f32 %v1165, 0.17087276
    %v1190 = vmul.f32 %v1166, 0.17087276
    %v1191 = vadd.f32 %v1183, -0.82215226
    %v1192 = vadd.f32 %v1184, -0.82215226
    %v1193 = vadd.f32 %v1185, -0.82215226
    %v1194 = vadd.f32 %v1186, -0.82215226
    %v1195 = vadd.f32 %v1187, -0.82215226
    %v1196 = vadd.f32 %v1188, -0.82215226
    %v1197 = vadd.f32 %v1189, -0.82215226
    %v1198 = vadd.f32 %v1190, -0.82215226
    %v1199 = vmul.f32 %v1159, %v1191
    %v1200 = vmul.f32 %v1160, %v1192
    %v1201 = vmul.f32 %v1161, %v1193
    %v1202 = vmul.f32 %v1162, %v1194
    %v1203 = vmul.f32 %v1163, %v1195
    %v1204 = vmul.f32 %v1164, %v1196
    %v1205 = vmul.f32 %v1165, %v1197
    %v1206 = vmul.f32 %v1166, %v1198
    %v1207 = vadd.f32 %v1199, 1.4885159
    %v1208 = vadd.f32 %v1200, 1.4885159
    %v1209 = vadd.f32 %v1201, 1.4885159
    %v1210 = vadd.f32 %v1202, 1.4885159
    %v1211 = vadd.f32 %v1203, 1.4885159
    %v1212 = vadd.f32 %v1204, 1.4885159
    %v1213 = vadd.f32 %v1205, 1.4885159
    %v1214 = vadd.f32 %v1206, 1.4885159
    %v1215 = vmul.f32 %v1159, %v1207
    %v1216 = vmul.f32 %v1160, %v1208
    %v1217 = vmul.f32 %v1161, %v1209
    %v1218 = vmul.f32 %v1162, %v1210
    %v1219 = vmul.f32 %v1163, %v1211
    %v1220 = vmul.f32 %v1164, %v1212
    %v1221 = vmul.f32 %v1165, %v1213
    %v1222 = vmul.f32 %v1166, %v1214
    %v1223 = vadd.f32 %v1215, -1.135204
    %v1224 = vadd.f32 %v1216, -1.135204
    %v1225 = vadd.f32 %v1217, -1.135204
    %v1226 = vadd.f32 %v1218, -1.135204
    %v1227 = vadd.f32 %v1219, -1.135204
    %v1228 = vadd.f32 %v1220, -1.135204
    %v1229 = vadd.f32 %v1221, -1.135204
    %v1230 = vadd.f32 %v1222, -1.135204
    %v1231 = vmul.f32 %v1159, %v1223
    %v1232 = vmul.f32 %v1160, %v1224
    %v1233 = vmul.f32 %v1161, %v1225
    %v1234 = vmul.f32 %v1162, %v1226
    %v1235 = vmul.f32 %v1163, %v1227
    %v1236 = vmul.f32 %v1164, %v1228
    %v1237 = vmul.f32 %v1165, %v1229
    %v1238 = vmul.f32 %v1166, %v1230
    %v1239 = vadd.f32 %v1231, 0.27886808
    %v1240 = vadd.f32 %v1232, 0.27886808
    %v1241 = vadd.f32 %v1233, 0.27886808
    %v1242 = vadd.f32 %v1234, 0.27886808
    %v1243 = vadd.f32 %v1235, 0.27886808
    %v1244 = vadd.f32 %v1236, 0.27886808
    %v1245 = vadd.f32 %v1237, 0.27886808
    %v1246 = vadd.f32 %v1238, 0.27886808
    %v1247 = vmul.f32 %v1159, %v1239
    %v1248 = vmul.f32 %v1160, %v1240
    %v1249 = vmul.f32 %v1161, %v1241
    %v1250 = vmul.f32 %v1162, %v1242
    %v1251 = vmul.f32 %v1163, %v1243
    %v1252 = vmul.f32 %v1164, %v1244
    %v1253 = vmul.f32 %v1165, %v1245
    %v1254 = vmul.f32 %v1166, %v1246
    %v1255 = vadd.f32 %v1247, -0.18628806
    %v1256 = vadd.f32 %v1248, -0.18628806
    %v1257 = vadd.f32 %v1249, -0.18628806
    %v1258 = vadd.f32 %v1250, -0.18628806
    %v1259 = vadd.f32 %v1251, -0.18628806
    %v1260 = vadd.f32 %v1252, -0.18628806
    %v1261 = vadd.f32 %v1253, -0.18628806
    %v1262 = vadd.f32 %v1254, -0.18628806
    %v1263 = vmul.f32 %v1159, %v1255
    %v1264 = vmul.f32 %v1160, %v1256
    %v1265 = vmul.f32 %v1161, %v1257
    %v1266 = vmul.f32 %v1162, %v1258
    %v1267 = vmul.f32 %v1163, %v1259
    %v1268 = vmul.f32 %v1164, %v1260
    %v1269 = vmul.f32 %v1165, %v1261
    %v1270 = vmul.f32 %v1166, %v1262
    %v1271 = vadd.f32 %v1263, 0.09678418
    %v1272 = vadd.f32 %v1264, 0.09678418
    %v1273 = vadd.f32 %v1265, 0.09678418
    %v1274 = vadd.f32 %v1266, 0.09678418
    %v1275 = vadd.f32 %v1267, 0.09678418
    %v1276 = vadd.f32 %v1268, 0.09678418
    %v1277 = vadd.f32 %v1269, 0.09678418
    %v1278 = vadd.f32 %v1270, 0.09678418
    %v1279 = vmul.f32 %v1159, %v1271
    %v1280 = vmul.f32 %v1160, %v1272
    %v1281 = vmul.f32 %v1161, %v1273
    %v1282 = vmul.f32 %v1162, %v1274
    %v1283 = vmul.f32 %v1163, %v1275
    %v1284 = vmul.f32 %v1164, %v1276
    %v1285 = vmul.f32 %v1165, %v1277
    %v1286 = vmul.f32 %v1166, %v1278
    %v1287 = vadd.f32 %v1279, 0.37409195
    %v1288 = vadd.f32 %v1280, 0.37409195
    %v1289 = vadd.f32 %v1281, 0.37409195
    %v1290 = vadd.f32 %v1282, 0.37409195
    %v1291 = vadd.f32 %v1283, 0.37409195
    %v1292 = vadd.f32 %v1284, 0.37409195
    %v1293 = vadd.f32 %v1285, 0.37409195
    %v1294 = vadd.f32 %v1286, 0.37409195
    %v1295 = vmul.f32 %v1159, %v1287
    %v1296 = vmul.f32 %v1160, %v1288
    %v1297 = vmul.f32 %v1161, %v1289
    %v1298 = vmul.f32 %v1162, %v1290
    %v1299 = vmul.f32 %v1163, %v1291
    %v1300 = vmul.f32 %v1164, %v1292
    %v1301 = vmul.f32 %v1165, %v1293
    %v1302 = vmul.f32 %v1166, %v1294
    %v1303 = vadd.f32 %v1295, 1.0000237
    %v1304 = vadd.f32 %v1296, 1.0000237
    %v1305 = vadd.f32 %v1297, 1.0000237
    %v1306 = vadd.f32 %v1298, 1.0000237
    %v1307 = vadd.f32 %v1299, 1.0000237
    %v1308 = vadd.f32 %v1300, 1.0000237
    %v1309 = vadd.f32 %v1301, 1.0000237
    %v1310 = vadd.f32 %v1302, 1.0000237
    %v1311 = vmul.f32 %v1159, %v1303
    %v1312 = vmul.f32 %v1160, %v1304
    %v1313 = vmul.f32 %v1161, %v1305
    %v1314 = vmul.f32 %v1162, %v1306
    %v1315 = vmul.f32 %v1163, %v1307
    %v1316 = vmul.f32 %v1164, %v1308
    %v1317 = vmul.f32 %v1165, %v1309
    %v1318 = vmul.f32 %v1166, %v1310
    %v1319 = vadd.f32 %v1311, -1.2655122
    %v1320 = vadd.f32 %v1312, -1.2655122
    %v1321 = vadd.f32 %v1313, -1.2655122
    %v1322 = vadd.f32 %v1314, -1.2655122
    %v1323 = vadd.f32 %v1315, -1.2655122
    %v1324 = vadd.f32 %v1316, -1.2655122
    %v1325 = vadd.f32 %v1317, -1.2655122
    %v1326 = vadd.f32 %v1318, -1.2655122
    %v1327 = vadd.f32 %v1175, %v1319
    %v1328 = vadd.f32 %v1176, %v1320
    %v1329 = vadd.f32 %v1177, %v1321
    %v1330 = vadd.f32 %v1178, %v1322
    %v1331 = vadd.f32 %v1179, %v1323
    %v1332 = vadd.f32 %v1180, %v1324
    %v1333 = vadd.f32 %v1181, %v1325
    %v1334 = vadd.f32 %v1182, %v1326
    %v1335 = vmul.f32 %v1327, 1.442695
    %v1336 = vpow.pop %v1335
    %v1337 = vmul.f32 %v1328, 1.442695
    %v1338 = vpow.pop %v1337
    %v1339 = vmul.f32 %v1329, 1.442695
    %v1340 = vpow.pop %v1339
    %v1341 = vmul.f32 %v1330, 1.442695
    %v1342 = vpow.pop %v1341
    %v1343 = vmul.f32 %v1331, 1.442695
    %v1344 = vpow.pop %v1343
    %v1345 = vmul.f32 %v1332, 1.442695
    %v1346 = vpow.pop %v1345
    %v1347 = vmul.f32 %v1333, 1.442695
    %v1348 = vpow.pop %v1347
    %v1349 = vmul.f32 %v1334, 1.442695
    %v1350 = vpow.pop %v1349
    %v1351 = vmul.f32 %v1159, %v1336
    %v1352 = vmul.f32 %v1160, %v1338
    %v1353 = vmul.f32 %v1161, %v1340
    %v1354 = vmul.f32 %v1162, %v1342
    %v1355 = vmul.f32 %v1163, %v1344
    %v1356 = vmul.f32 %v1164, %v1346
    %v1357 = vmul.f32 %v1165, %v1348
    %v1358 = vmul.f32 %v1166, %v1350
    %vm1359 = vcmp.ge.f32.partialorder %v1103, 0.0
    %vm1360 = vcmp.ge.f32.partialorder %v1104, 0.0
    %vm1361 = vcmp.ge.f32.partialorder %v1105, 0.0
    %vm1362 = vcmp.ge.f32.partialorder %v1106, 0.0
    %vm1363 = vcmp.ge.f32.partialorder %v1107, 0.0
    %vm1364 = vcmp.ge.f32.partialorder %v1108, 0.0
    %vm1365 = vcmp.ge.f32.partialorder %v1109, 0.0
    %vm1366 = vcmp.ge.f32.partialorder %v1110, 0.0
    %v1367 = vsub.f32 1.0, %v1351
    %v1368 = vsub.f32 1.0, %v1352
    %v1369 = vsub.f32 1.0, %v1353
    %v1370 = vsub.f32 1.0, %v1354
    %v1371 = vsub.f32 1.0, %v1355
    %v1372 = vsub.f32 1.0, %v1356
    %v1373 = vsub.f32 1.0, %v1357
    %v1374 = vsub.f32 1.0, %v1358
    %v1375 = vsub.f32 %v1351, 1.0
    %v1376 = vsub.f32 %v1352, 1.0
    %v1377 = vsub.f32 %v1353, 1.0
    %v1378 = vsub.f32 %v1354, 1.0
    %v1379 = vsub.f32 %v1355, 1.0
    %v1380 = vsub.f32 %v1356, 1.0
    %v1381 = vsub.f32 %v1357, 1.0
    %v1382 = vsub.f32 %v1358, 1.0
    %v1383 = vsel %vm1359, %v1367, %v1375
    %v1384 = vsel %vm1360, %v1368, %v1376
    %v1385 = vsel %vm1361, %v1369, %v1377
    %v1386 = vsel %vm1362, %v1370, %v1378
    %v1387 = vsel %vm1363, %v1371, %v1379
    %v1388 = vsel %vm1364, %v1372, %v1380
    %v1389 = vsel %vm1365, %v1373, %v1381
    %v1390 = vsel %vm1366, %v1374, %v1382
    %v1391 = vadd.f32 %v1383, 1.0
    %v1392 = vadd.f32 %v1384, 1.0
    %v1393 = vadd.f32 %v1385, 1.0
    %v1394 = vadd.f32 %v1386, 1.0
    %v1395 = vadd.f32 %v1387, 1.0
    %v1396 = vadd.f32 %v1388, 1.0
    %v1397 = vadd.f32 %v1389, 1.0
    %v1398 = vadd.f32 %v1390, 1.0
    %v1399 = vmul.f32 %v1095, %v1391
    %v1400 = vmul.f32 %v1096, %v1392
    %v1401 = vmul.f32 %v1097, %v1393
    %v1402 = vmul.f32 %v1098, %v1394
    %v1403 = vmul.f32 %v1099, %v1395
    %v1404 = vmul.f32 %v1100, %v1396
    %v1405 = vmul.f32 %v1101, %v1397
    %v1406 = vmul.f32 %v1102, %v1398
    %v1407 = vadd.f32 %v1399, %v1400
    %1408 = vadd.xlane.f32.xlu0 %v1407
    %v1409 = vpop.xlane.xlu0 %1408
    %v1410 = vadd.f32 %v1401, %v1402
    %1411 = vadd.xlane.f32.xlu0 %v1410
    %v1412 = vpop.xlane.xlu0 %1411
    %v1413 = vadd.f32 %v1403, %v1404
    %1414 = vadd.xlane.f32.xlu0 %v1413
    %v1415 = vpop.xlane.xlu0 %1414
    %v1416 = vadd.f32 %v1405, %v1406
    %1417 = vadd.xlane.f32.xlu0 %v1416
    %v1418 = vpop.xlane.xlu0 %1417
    %v1419 = vmul.f32 %v1409, 0.00390625
    %v1420 = vmul.f32 %v1412, 0.00390625
    %v1421 = vmul.f32 %v1415, 0.00390625
    %v1422 = vmul.f32 %v1418, 0.00390625
    %v1423 = vmul.f32 %v1399, %v1399
    %v1424 = vmul.f32 %v1400, %v1400
    %v1425 = vmul.f32 %v1401, %v1401
    %v1426 = vmul.f32 %v1402, %v1402
    %v1427 = vmul.f32 %v1403, %v1403
    %v1428 = vmul.f32 %v1404, %v1404
    %v1429 = vmul.f32 %v1405, %v1405
    %v1430 = vmul.f32 %v1406, %v1406
    %v1431 = vadd.f32 %v1423, %v1424
    %1432 = vadd.xlane.f32.xlu0 %v1431
    %v1433 = vpop.xlane.xlu0 %1432
    %v1434 = vadd.f32 %v1425, %v1426
    %1435 = vadd.xlane.f32.xlu0 %v1434
    %v1436 = vpop.xlane.xlu0 %1435
    %v1437 = vadd.f32 %v1427, %v1428
    %1438 = vadd.xlane.f32.xlu0 %v1437
    %v1439 = vpop.xlane.xlu0 %1438
    %v1440 = vadd.f32 %v1429, %v1430
    %1441 = vadd.xlane.f32.xlu0 %v1440
    %v1442 = vpop.xlane.xlu0 %1441
    %v1443 = vmul.f32 %v1433, 0.00390625
    %v1444 = vmul.f32 %v1436, 0.00390625
    %v1445 = vmul.f32 %v1439, 0.00390625
    %v1446 = vmul.f32 %v1442, 0.00390625
    %v1447 = vmul.f32 %v1419, %v1419
    %v1448 = vmul.f32 %v1420, %v1420
    %v1449 = vmul.f32 %v1421, %v1421
    %v1450 = vmul.f32 %v1422, %v1422
    %v1451 = vsub.f32 %v1443, %v1447
    %v1452 = vsub.f32 %v1444, %v1448
    %v1453 = vsub.f32 %v1445, %v1449
    %v1454 = vsub.f32 %v1446, %v1450
    %v1455 = vmax.f32 %v1451, 0.0
    %v1456 = vmax.f32 %v1452, 0.0
    %v1457 = vmax.f32 %v1453, 0.0
    %v1458 = vmax.f32 %v1454, 0.0
    %v1459 = vsub.f32 %v1399, %v1419
    %v1460 = vsub.f32 %v1400, %v1419
    %v1461 = vsub.f32 %v1401, %v1420
    %v1462 = vsub.f32 %v1402, %v1420
    %v1463 = vsub.f32 %v1403, %v1421
    %v1464 = vsub.f32 %v1404, %v1421
    %v1465 = vsub.f32 %v1405, %v1422
    %v1466 = vsub.f32 %v1406, %v1422
    %v1467 = vadd.f32 %v1455, 1e-05
    %v1468 = vadd.f32 %v1456, 1e-05
    %v1469 = vadd.f32 %v1457, 1e-05
    %v1470 = vadd.f32 %v1458, 1e-05
    %v1471 = vrsqrt.pop %v1467
    %v1472 = vrsqrt.pop %v1468
    %v1473 = vrsqrt.pop %v1469
    %v1474 = vrsqrt.pop %v1470
    %v1475 = vmul.f32 %v1471, %v40
    %v1476 = vmul.f32 %v1472, %v41
    %v1477 = vmul.f32 %v1473, %v42
    %v1478 = vmul.f32 %v1474, %v43
    %1480 = vset.pattern.permute.xlu0 13
    %1481 = vperm.xlu0 %1480, %v1475
    %v1482 = vpop.permute.xlu0 %1481
    %1485 = vset.pattern.permute.xlu0 13
    %1486 = vperm.xlu0 %1485, %v1476
    %v1487 = vpop.permute.xlu0 %1486
    %1490 = vset.pattern.permute.xlu0 13
    %1491 = vperm.xlu0 %1490, %v1477
    %v1492 = vpop.permute.xlu0 %1491
    %1495 = vset.pattern.permute.xlu0 13
    %1496 = vperm.xlu0 %1495, %v1478
    %v1497 = vpop.permute.xlu0 %1496
    %v1499 = vmul.f32 %v1459, %v1482
    %v1500 = vmul.f32 %v1460, %v1482
    %v1501 = vmul.f32 %v1461, %v1487
    %v1502 = vmul.f32 %v1462, %v1487
    %v1503 = vmul.f32 %v1463, %v1492
    %v1504 = vmul.f32 %v1464, %v1492
    %v1505 = vmul.f32 %v1465, %v1497
    %v1506 = vmul.f32 %v1466, %v1497
    %1507 = vset.pattern.permute.xlu0 14
    %1508 = vperm.xlu0 %1507, %v40
    %v1509 = vpop.permute.xlu0 %1508
    %1511 = vset.pattern.permute.xlu0 14
    %1512 = vperm.xlu0 %1511, %v41
    %v1513 = vpop.permute.xlu0 %1512
    %1515 = vset.pattern.permute.xlu0 14
    %1516 = vperm.xlu0 %1515, %v42
    %v1517 = vpop.permute.xlu0 %1516
    %1519 = vset.pattern.permute.xlu0 14
    %1520 = vperm.xlu0 %1519, %v43
    %v1521 = vpop.permute.xlu0 %1520
    %v1523 = vadd.f32 %v1499, %v1509
    %v1524 = vadd.f32 %v1500, %v1509
    %v1525 = vadd.f32 %v1501, %v1513
    %v1526 = vadd.f32 %v1502, %v1513
    %v1527 = vadd.f32 %v1503, %v1517
    %v1528 = vadd.f32 %v1504, %v1517
    %v1529 = vadd.f32 %v1505, %v1521
    %v1530 = vadd.f32 %v1506, %v1521
    %v1531 = vadd.f32 %v1523, %v32
    %v1532 = vadd.f32 %v1524, %v33
    %v1533 = vadd.f32 %v1525, %v34
    %v1534 = vadd.f32 %v1526, %v35
    %v1535 = vadd.f32 %v1527, %v36
    %v1536 = vadd.f32 %v1528, %v37
    %v1537 = vadd.f32 %v1529, %v38
    %v1538 = vadd.f32 %v1530, %v39
    %1539 = vst [vmem:[#allocation5] sm:$0xff] %v1531
    %1540 = vst [vmem:[#allocation5 + $0x8] sm:$0xff] %v1532
    %1541 = vst [vmem:[#allocation5 + $0x10] sm:$0xff] %v1533
    %1542 = vst [vmem:[#allocation5 + $0x18] sm:$0xff] %v1534
    %1543 = vst [vmem:[#allocation5 + $0x20] sm:$0xff] %v1535
    %1544 = vst [vmem:[#allocation5 + $0x28] sm:$0xff] %v1536
    %1545 = vst [vmem:[#allocation5 + $0x30] sm:$0xff] %v1537
    %1546 = vst [vmem:[#allocation5 + $0x38] sm:$0xff] %v1538
    // Predicated region
    $region22: #{tpu_custom_call.1} parent=1 // pred_check
      _
    $region23: #{tpu_custom_call.1} parent=1 // pred_check_branch
      %1548 = sbr.rel (0) target = $region25
    $region24: #{tpu_custom_call.1} parent=1 // pred_region
      %s1550 = ssub.s32 1024, 1024
      %1551 = vsyncadd [#allocation4], %s1550
      %s1552 = sshll.u32 [#allocation5], 4
      %s1553 = int_to_ptr.vmem [resolvable:$true] %s1552
      %1558 = dma.vmem_to_hbm [thread:$0]  %s1553, 1024, %s4, [#allocation4], 256, 256, 16
    $region25: #{tpu_custom_call.1} parent=1 // pred_fallthru
      _
    // Predicated region
    $region26: #{tpu_custom_call.1} parent=1 // pred_check
      _
    $region27: #{tpu_custom_call.1} parent=1 // pred_check_branch
      %1560 = sbr.rel (0) target = $region29
    $region28: #{tpu_custom_call.1} parent=1 // pred_region
      %1561 = dma.done [#allocation4], 1024
    $region29: #{tpu_custom_call.1} parent=1 // pred_fallthru
      _
    %1562 = vsyncpa [#allocation3], 1
    %1563 = vsyncpa [#allocation4], 1

</llo_original>
